<compile_context>
chip_gen: v7x
topology: tpu7x:2x2x1
jax: 0.10.0
libtpu: 0.0.40
codegen_flags: <defaults>
</compile_context>

<pallas_src>
import math
import functools

import jax
import jax.numpy as jnp
from jax import lax
from jax.experimental import pallas as pl
from jax.experimental.pallas import tpu as pltpu


def _round_up(x: int, m: int) -> int:
    return ((x + m - 1) // m) * m


def _cdiv(a: int, b: int) -> int:
    return -(-a // b)


def _oc_tile_candidates(ocp: int):
    """Descending multiples of 128 (<=512) that divide ocp (ocp % 128 == 0)."""
    return [t for t in (512, 384, 256, 128) if ocp % t == 0]


def _vmem_budget_bytes() -> int:
    """Per-generation VMEM budget: physical capacity minus headroom."""
    try:
        info = pltpu.get_tpu_info()
        cap = int(getattr(info, "vmem_capacity_bytes", 0) or 0)
        if cap <= 0:
            cap = 128 * 1024 * 1024
    except Exception:
        cap = 64 * 1024 * 1024          # unknown chip: be conservative (v7x-safe)
    return max(32 * 1024 * 1024, cap - 16 * 1024 * 1024)


@functools.partial(jax.jit, static_argnames=("stride",))
def conv2d_fft_pallas(x, weight, bias, stride):
    """Valid conv2d (cross-correlation) with stride + bias (fft_conv semantics).

    x:      (N, C, H, W)    float32
    weight: (OC, C, KH, KW) float32
    bias:   (OC,)           float32 (pass zeros for bias=False)
    returns (N, OC, OH, OW) float32
    """
    n, c, h, w = x.shape
    oc, _, kh, kw = weight.shape
    sh, sw = stride
    oh = (h - kh) // sh + 1
    ow = (w - kw) // sw + 1

    qimax = (kh - 1) // sh              # OH-halo depth in phase rows
    qjmax = (kw - 1) // sw              # OW-halo depth in phase cols

    # ---- static layout / tiling decisions -------------------------------
    # Lane-align channels only when C is large enough that zero-padding does
    # not multiply the MXU K work.
    cp = _round_up(c, 128) if c >= 64 else c
    kfp = kh * kw * cp
    ocp = _round_up(oc, 128)
    toc_cands = _oc_tile_candidates(ocp)
    toc = toc_cands[0]

    # owp is sublane-tile aligned (bf16 tile = (16, 128)) so the in-kernel
    # (toh, owp, kfp) -> (toh*owp, kfp) collapse is layout-preserving.
    owp = _round_up(ow, 16)
    gph = (qimax + 1) * sh * sw

    budget = _vmem_budget_bytes()
    toh = max(1, min(oh, 512 // owp))   # target mt = toh*owp ~ 512 MXU rows

    def _footprint(toh_: int, toc_: int) -> int:
        mt_ = toh_ * owp
        ws_pad_ = max(_cdiv(w, sw), qjmax + owp)
        x_blk = gph * toh_ * ws_pad_ * cp * 2          # bf16
        w_blk = kfp * toc_ * 2                          # bf16
        b_blk = toc_ * 4                                # f32
        o_blk = mt_ * toc_ * 4                          # f32
        scr = toh_ * owp * _round_up(kfp, 128) * 2      # bf16 scratch (lane pad)
        return 2 * (x_blk + w_blk + b_blk + o_blk) + scr

    while _footprint(toh, toc) > budget and toh > 1:
        toh = max(1, toh // 2)
    ti = 0
    while _footprint(toh, toc) > budget and ti + 1 < len(toc_cands):
        ti += 1
        toc = toc_cands[ti]

    mt = toh * owp
    ohp = _round_up(oh, toh)

    # ---- JAX-side prep (single O(input) passes, fused by XLA) ------------
    # Phase decomposition over the stride + a small OH-halo leading axis:
    #   x_ph2[qi*sh*sw + ri*sw + rj, n, v, u, cc] = x[n, cc, sh*(v+qi)+ri, sw*u+rj]
    # so every in-kernel tap access is a contiguous blocked slice.
    hs = _cdiv(h, sh)
    ws = _cdiv(w, sw)
    hs_pad = max(hs, ohp + qimax)
    ws_pad = max(ws, qjmax + owp)
    hp, wp = hs_pad * sh, ws_pad * sw

    x_nhwc = jnp.transpose(x, (0, 2, 3, 1)).astype(jnp.bfloat16)     # (N,H,W,C)
    x_nhwc = jnp.pad(x_nhwc, ((0, 0), (0, hp - h), (0, wp - w), (0, cp - c)))
    x_ph = x_nhwc.reshape(n, hs_pad, sh, ws_pad, sw, cp)
    x_ph = jnp.transpose(x_ph, (2, 4, 0, 1, 3, 5))          # (sh,sw,N,Hs,Ws,Cp)
    x_ph2 = jnp.stack([x_ph[:, :, :, qi:qi + ohp] for qi in range(qimax + 1)], 0)
    x_ph2 = x_ph2.reshape(gph, n, ohp, ws_pad, cp)          # (G,N,OHp,Ws,Cp) bf16

    # Weight as (KH*KW*Cp, OCp) with feature order (i, j, c); bias as (1, OCp).
    w_pad = jnp.pad(weight, ((0, 0), (0, cp - c), (0, 0), (0, 0)))
    w_mat = jnp.transpose(w_pad, (2, 3, 1, 0)).reshape(kfp, oc)
    w_mat = jnp.pad(w_mat, ((0, 0), (0, ocp - oc))).astype(jnp.bfloat16)
    b_mat = jnp.pad(bias.astype(jnp.float32), (0, ocp - oc)).reshape(1, ocp)

    # ---- kernel ----------------------------------------------------------
    def kernel(x_ref, w_ref, b_ref, o_ref, p_scr):
        # im2col: one contiguous (toh, owp, cp) copy per tap into VMEM scratch.
        for i in range(kh):
            qi, ri = divmod(i, sh)
            for j in range(kw):
                qj, rj = divmod(j, sw)
                gidx = qi * sh * sw + ri * sw + rj
                t = i * kw + j
                p_scr[:, :, pl.ds(t * cp, cp)] = \
                    x_ref[gidx, 0, :, pl.ds(qj, owp), :]
        # Single MXU matmul (bf16 x bf16 -> f32) + bias.  The leading-dim
        # collapse is layout-preserving because owp % 16 == 0.
        acc = jnp.dot(p_scr[...].reshape(mt, kfp), w_ref[...],
                      preferred_element_type=jnp.float32)
        o_ref[0] = acc + b_ref[...]

    # Innermost grid axis = OH tiles -> weight/bias blocks stay VMEM-resident.
    grid = (n, ocp // toc, ohp // toh)

    fp = _footprint(toh, toc)
    vmem_limit = int(min(budget, max(32 * 1024 * 1024, fp + (4 << 20))))

    out_flat = pl.pallas_call(
        kernel,
        out_shape=jax.ShapeDtypeStruct((n, ohp * owp, ocp), jnp.float32),
        grid_spec=pltpu.PrefetchScalarGridSpec(
            num_scalar_prefetch=0,
            grid=grid,
            in_specs=[
                # OH-tiled, halo-carrying input block (streamed, double-buffered)
                pl.BlockSpec((gph, 1, toh, ws_pad, cp),
                             lambda bn, bc, bh: (0, bn, bh, 0, 0)),
                # weight tile: constant over the inner OH axis -> resident
                pl.BlockSpec((kfp, toc), lambda bn, bc, bh: (0, bc)),
                pl.BlockSpec((1, toc), lambda bn, bc, bh: (0, bc)),
            ],
            out_specs=pl.BlockSpec((1, mt, toc),
                                   lambda bn, bc, bh: (bn, bh, bc)),
            scratch_shapes=[pltpu.VMEM((toh, owp, kfp), jnp.bfloat16)],
        ),
        compiler_params=pltpu.CompilerParams(
            dimension_semantics=("parallel", "parallel", "parallel"),
            vmem_limit_bytes=vmem_limit,
        ),
    )(x_ph2, w_mat, b_mat)

    # Lane-dense (OCp) output from the kernel; one fused XLA pass to NCHW.
    out = out_flat.reshape(n, ohp, owp, ocp)[:, :oh, :ow, :oc]
    out = jnp.transpose(out, (0, 3, 1, 2))
    return out


# ---------------------------------------------------------------------------
# Parameter init mirroring the PyTorch module (deterministic, synthetic)
# ---------------------------------------------------------------------------
def init_conv2d_params(key, in_channels, out_channels, kernel_size, bound=5.0):
    kh, kw = kernel_size
    k_w, k_b = jax.random.split(key)
    fan_in = in_channels * kh * kw
    gain = math.sqrt(2.0 / (1.0 + 5.0))          # kaiming_uniform_(a=sqrt(5))
    w_bound = gain * math.sqrt(3.0 / fan_in)
    weight = jax.random.uniform(
        k_w, (out_channels, in_channels, kh, kw),
        minval=-w_bound, maxval=w_bound, dtype=jnp.float32)
    bias = jax.random.uniform(
        k_b, (out_channels,), minval=-bound, maxval=bound, dtype=jnp.float32)
    return weight, bias


if __name__ == "__main__":
    key = jax.random.PRNGKey(0)
    k_x, k_p = jax.random.split(key)

    N, C, H, W = 2, 4, 16, 16
    OC = 8
    KS = (3, 3)
    STRIDE = (2, 2)

    x = jax.random.normal(k_x, (N, C, H, W), dtype=jnp.float32)
    weight, bias = init_conv2d_params(k_p, C, OC, KS)

    out = conv2d_fft_pallas(x, weight, bias, stride=STRIDE)
    out = jax.block_until_ready(out)

    # Reference: XLA conv on the same bf16-cast operands with f32 accumulation
    # (matches the kernel's numerics; fft_conv semantics = VALID xcorr + bias).
    ref = lax.conv_general_dilated(
        x.astype(jnp.bfloat16), weight.astype(jnp.bfloat16),
        window_strides=STRIDE, padding="VALID",
        dimension_numbers=("NCHW", "OIHW", "NCHW"),
        preferred_element_type=jnp.float32)
    ref = ref + bias[None, :, None, None]

    expected_shape = (N, OC, (H - KS[0]) // STRIDE[0] + 1,
                      (W - KS[1]) // STRIDE[1] + 1)
    assert out.shape == expected_shape, (out.shape, expected_shape)
    assert jnp.allclose(out, ref, atol=2e-2, rtol=2e-2), \
        float(jnp.max(jnp.abs(out - ref)))

    print("KERNEL_OK")
</pallas_src>

<mosaic_0001>
module attributes {stable_mosaic.version = 11 : i64} {
  func.func @kernel(%arg0: i32, %arg1: i32, %arg2: i32, %arg3: memref<8x1x7x17x4xbf16, #tpu.memory_space<vmem>>, %arg4: memref<36x128xbf16, #tpu.memory_space<vmem>>, %arg5: memref<1x128xf32, #tpu.memory_space<vmem>>, %arg6: memref<1x112x128xf32, #tpu.memory_space<vmem>>, %arg7: memref<7x16x36xbf16, #tpu.memory_space<vmem>>) attributes {dimension_semantics = [#tpu.dimension_semantics<parallel>, #tpu.dimension_semantics<parallel>, #tpu.dimension_semantics<parallel>], iteration_bounds = array<i64: 2, 1, 1>, scalar_prefetch = 0 : i64, scratch_operands = 1 : i64, tpu.core_type = #tpu.core_type<tc>, window_params = [{transform_indices = @transform_0, window_bounds = array<i64: 8, 1, 7, 17, 4>}, {transform_indices = @transform_1, window_bounds = array<i64: 36, 128>}, {transform_indices = @transform_2, window_bounds = array<i64: 1, 128>}, {transform_indices = @transform_3, window_bounds = array<i64: 1, 112, 128>}]} {
    %c0 = arith.constant 0 : index
    %c0_0 = arith.constant 0 : index
    %c0_1 = arith.constant 0 : index
    %c0_2 = arith.constant 0 : index
    %c0_3 = arith.constant 0 : index
    %0 = vector.load %arg3[%c0, %c0_0, %c0_1, %c0_2, %c0_3] : memref<8x1x7x17x4xbf16, #tpu.memory_space<vmem>>, vector<1x1x7x16x4xbf16>
    %1 = vector.shape_cast %0 : vector<1x1x7x16x4xbf16> to vector<7x16x4xbf16>
    %c0_4 = arith.constant 0 : index
    %c0_5 = arith.constant 0 : index
    %c0_6 = arith.constant 0 : index
    %2 = vector.load %arg7[%c0_4, %c0_5, %c0_6] : memref<7x16x36xbf16, #tpu.memory_space<vmem>>, vector<7x16x4xbf16>
    tpu.vector_store %arg7[%c0_4, %c0_5, %c0_6], %1 {strides = array<i32>} : memref<7x16x36xbf16, #tpu.memory_space<vmem>>, vector<7x16x4xbf16>,
    %c1 = arith.constant 1 : index
    %c0_7 = arith.constant 0 : index
    %c0_8 = arith.constant 0 : index
    %c0_9 = arith.constant 0 : index
    %c0_10 = arith.constant 0 : index
    %3 = vector.load %arg3[%c1, %c0_7, %c0_8, %c0_9, %c0_10] : memref<8x1x7x17x4xbf16, #tpu.memory_space<vmem>>, vector<1x1x7x16x4xbf16>
    %4 = vector.shape_cast %3 : vector<1x1x7x16x4xbf16> to vector<7x16x4xbf16>
    %c0_11 = arith.constant 0 : index
    %c0_12 = arith.constant 0 : index
    %c4 = arith.constant 4 : index
    %5 = vector.load %arg7[%c0_11, %c0_12, %c4] : memref<7x16x36xbf16, #tpu.memory_space<vmem>>, vector<7x16x4xbf16>
    tpu.vector_store %arg7[%c0_11, %c0_12, %c4], %4 {strides = array<i32>} : memref<7x16x36xbf16, #tpu.memory_space<vmem>>, vector<7x16x4xbf16>,
    %c0_13 = arith.constant 0 : index
    %c0_14 = arith.constant 0 : index
    %c0_15 = arith.constant 0 : index
    %c1_16 = arith.constant 1 : index
    %c0_17 = arith.constant 0 : index
    %6 = vector.load %arg3[%c0_13, %c0_14, %c0_15, %c1_16, %c0_17] : memref<8x1x7x17x4xbf16, #tpu.memory_space<vmem>>, vector<1x1x7x16x4xbf16>
    %7 = vector.shape_cast %6 : vector<1x1x7x16x4xbf16> to vector<7x16x4xbf16>
    %c0_18 = arith.constant 0 : index
    %c0_19 = arith.constant 0 : index
    %c8 = arith.constant 8 : index
    %8 = vector.load %arg7[%c0_18, %c0_19, %c8] : memref<7x16x36xbf16, #tpu.memory_space<vmem>>, vector<7x16x4xbf16>
    tpu.vector_store %arg7[%c0_18, %c0_19, %c8], %7 {strides = array<i32>} : memref<7x16x36xbf16, #tpu.memory_space<vmem>>, vector<7x16x4xbf16>,
    %c2 = arith.constant 2 : index
    %c0_20 = arith.constant 0 : index
    %c0_21 = arith.constant 0 : index
    %c0_22 = arith.constant 0 : index
    %c0_23 = arith.constant 0 : index
    %9 = vector.load %arg3[%c2, %c0_20, %c0_21, %c0_22, %c0_23] : memref<8x1x7x17x4xbf16, #tpu.memory_space<vmem>>, vector<1x1x7x16x4xbf16>
    %10 = vector.shape_cast %9 : vector<1x1x7x16x4xbf16> to vector<7x16x4xbf16>
    %c0_24 = arith.constant 0 : index
    %c0_25 = arith.constant 0 : index
    %c12 = arith.constant 12 : index
    %11 = vector.load %arg7[%c0_24, %c0_25, %c12] : memref<7x16x36xbf16, #tpu.memory_space<vmem>>, vector<7x16x4xbf16>
    tpu.vector_store %arg7[%c0_24, %c0_25, %c12], %10 {strides = array<i32>} : memref<7x16x36xbf16, #tpu.memory_space<vmem>>, vector<7x16x4xbf16>,
    %c3 = arith.constant 3 : index
    %c0_26 = arith.constant 0 : index
    %c0_27 = arith.constant 0 : index
    %c0_28 = arith.constant 0 : index
    %c0_29 = arith.constant 0 : index
    %12 = vector.load %arg3[%c3, %c0_26, %c0_27, %c0_28, %c0_29] : memref<8x1x7x17x4xbf16, #tpu.memory_space<vmem>>, vector<1x1x7x16x4xbf16>
    %13 = vector.shape_cast %12 : vector<1x1x7x16x4xbf16> to vector<7x16x4xbf16>
    %c0_30 = arith.constant 0 : index
    %c0_31 = arith.constant 0 : index
    %c16 = arith.constant 16 : index
    %14 = vector.load %arg7[%c0_30, %c0_31, %c16] : memref<7x16x36xbf16, #tpu.memory_space<vmem>>, vector<7x16x4xbf16>
    tpu.vector_store %arg7[%c0_30, %c0_31, %c16], %13 {strides = array<i32>} : memref<7x16x36xbf16, #tpu.memory_space<vmem>>, vector<7x16x4xbf16>,
    %c2_32 = arith.constant 2 : index
    %c0_33 = arith.constant 0 : index
    %c0_34 = arith.constant 0 : index
    %c1_35 = arith.constant 1 : index
    %c0_36 = arith.constant 0 : index
    %15 = vector.load %arg3[%c2_32, %c0_33, %c0_34, %c1_35, %c0_36] : memref<8x1x7x17x4xbf16, #tpu.memory_space<vmem>>, vector<1x1x7x16x4xbf16>
    %16 = vector.shape_cast %15 : vector<1x1x7x16x4xbf16> to vector<7x16x4xbf16>
    %c0_37 = arith.constant 0 : index
    %c0_38 = arith.constant 0 : index
    %c20 = arith.constant 20 : index
    %17 = vector.load %arg7[%c0_37, %c0_38, %c20] : memref<7x16x36xbf16, #tpu.memory_space<vmem>>, vector<7x16x4xbf16>
    tpu.vector_store %arg7[%c0_37, %c0_38, %c20], %16 {strides = array<i32>} : memref<7x16x36xbf16, #tpu.memory_space<vmem>>, vector<7x16x4xbf16>,
    %c4_39 = arith.constant 4 : index
    %c0_40 = arith.constant 0 : index
    %c0_41 = arith.constant 0 : index
    %c0_42 = arith.constant 0 : index
    %c0_43 = arith.constant 0 : index
    %18 = vector.load %arg3[%c4_39, %c0_40, %c0_41, %c0_42, %c0_43] : memref<8x1x7x17x4xbf16, #tpu.memory_space<vmem>>, vector<1x1x7x16x4xbf16>
    %19 = vector.shape_cast %18 : vector<1x1x7x16x4xbf16> to vector<7x16x4xbf16>
    %c0_44 = arith.constant 0 : index
    %c0_45 = arith.constant 0 : index
    %c24 = arith.constant 24 : index
    %20 = vector.load %arg7[%c0_44, %c0_45, %c24] : memref<7x16x36xbf16, #tpu.memory_space<vmem>>, vector<7x16x4xbf16>
    tpu.vector_store %arg7[%c0_44, %c0_45, %c24], %19 {strides = array<i32>} : memref<7x16x36xbf16, #tpu.memory_space<vmem>>, vector<7x16x4xbf16>,
    %c5 = arith.constant 5 : index
    %c0_46 = arith.constant 0 : index
    %c0_47 = arith.constant 0 : index
    %c0_48 = arith.constant 0 : index
    %c0_49 = arith.constant 0 : index
    %21 = vector.load %arg3[%c5, %c0_46, %c0_47, %c0_48, %c0_49] : memref<8x1x7x17x4xbf16, #tpu.memory_space<vmem>>, vector<1x1x7x16x4xbf16>
    %22 = vector.shape_cast %21 : vector<1x1x7x16x4xbf16> to vector<7x16x4xbf16>
    %c0_50 = arith.constant 0 : index
    %c0_51 = arith.constant 0 : index
    %c28 = arith.constant 28 : index
    %23 = vector.load %arg7[%c0_50, %c0_51, %c28] : memref<7x16x36xbf16, #tpu.memory_space<vmem>>, vector<7x16x4xbf16>
    tpu.vector_store %arg7[%c0_50, %c0_51, %c28], %22 {strides = array<i32>} : memref<7x16x36xbf16, #tpu.memory_space<vmem>>, vector<7x16x4xbf16>,
    %c4_52 = arith.constant 4 : index
    %c0_53 = arith.constant 0 : index
    %c0_54 = arith.constant 0 : index
    %c1_55 = arith.constant 1 : index
    %c0_56 = arith.constant 0 : index
    %24 = vector.load %arg3[%c4_52, %c0_53, %c0_54, %c1_55, %c0_56] : memref<8x1x7x17x4xbf16, #tpu.memory_space<vmem>>, vector<1x1x7x16x4xbf16>
    %25 = vector.shape_cast %24 : vector<1x1x7x16x4xbf16> to vector<7x16x4xbf16>
    %c0_57 = arith.constant 0 : index
    %c0_58 = arith.constant 0 : index
    %c32 = arith.constant 32 : index
    %26 = vector.load %arg7[%c0_57, %c0_58, %c32] : memref<7x16x36xbf16, #tpu.memory_space<vmem>>, vector<7x16x4xbf16>
    tpu.vector_store %arg7[%c0_57, %c0_58, %c32], %25 {strides = array<i32>} : memref<7x16x36xbf16, #tpu.memory_space<vmem>>, vector<7x16x4xbf16>,
    %c0_59 = arith.constant 0 : index
    %c0_60 = arith.constant 0 : index
    %c0_61 = arith.constant 0 : index
    %27 = vector.load %arg7[%c0_59, %c0_60, %c0_61] : memref<7x16x36xbf16, #tpu.memory_space<vmem>>, vector<7x16x36xbf16>
    %28 = vector.shape_cast %27 : vector<7x16x36xbf16> to vector<112x36xbf16>
    %c0_62 = arith.constant 0 : index
    %c0_63 = arith.constant 0 : index
    %29 = vector.load %arg4[%c0_62, %c0_63] : memref<36x128xbf16, #tpu.memory_space<vmem>>, vector<36x128xbf16>
    %cst = arith.constant dense<0.000000e+00> : vector<112x128xf32>
    %30 = tpu.matmul %28, %29, %cst {dimension_numbers = #tpu.dot_dimension_numbers<[1], [0], [0], [1], [0, 0, 1, 1], [], []>} : vector<112x36xbf16>, vector<36x128xbf16>, vector<112x128xf32> -> vector<112x128xf32>
    %c0_64 = arith.constant 0 : index
    %c0_65 = arith.constant 0 : index
    %31 = vector.load %arg5[%c0_64, %c0_65] : memref<1x128xf32, #tpu.memory_space<vmem>>, vector<1x128xf32>
    %32 = vector.broadcast %31 : vector<1x128xf32> to vector<112x128xf32>
    %33 = arith.addf %30, %32 : vector<112x128xf32>
    %c0_66 = arith.constant 0 : index
    %c0_67 = arith.constant 0 : index
    %c0_68 = arith.constant 0 : index
    %34 = vector.load %arg6[%c0_66, %c0_67, %c0_68] : memref<1x112x128xf32, #tpu.memory_space<vmem>>, vector<1x112x128xf32>
    %35 = vector.shape_cast %34 : vector<1x112x128xf32> to vector<112x128xf32>
    %36 = vector.shape_cast %33 : vector<112x128xf32> to vector<1x112x128xf32>
    tpu.vector_store %arg6[%c0_66, %c0_67, %c0_68], %36 {strides = array<i32>} : memref<1x112x128xf32, #tpu.memory_space<vmem>>, vector<1x112x128xf32>,
    return
  }
  func.func @transform_0(%arg0: i32, %arg1: i32, %arg2: i32) -> (i32, i32, i32, i32, i32) {
    %c0_i32 = arith.constant 0 : i32
    %c0_i32_0 = arith.constant 0 : i32
    %c0_i32_1 = arith.constant 0 : i32
    %c0_i32_2 = arith.constant 0 : i32
    return %c0_i32, %arg0, %arg2, %c0_i32_0, %c0_i32_1 : i32, i32, i32, i32, i32
  }
  func.func @transform_1(%arg0: i32, %arg1: i32, %arg2: i32) -> (i32, i32) {
    %c0_i32 = arith.constant 0 : i32
    %c0_i32_0 = arith.constant 0 : i32
    return %c0_i32, %arg1 : i32, i32
  }
  func.func @transform_2(%arg0: i32, %arg1: i32, %arg2: i32) -> (i32, i32) {
    %c0_i32 = arith.constant 0 : i32
    %c0_i32_0 = arith.constant 0 : i32
    return %c0_i32, %arg1 : i32, i32
  }
  func.func @transform_3(%arg0: i32, %arg1: i32, %arg2: i32) -> (i32, i32, i32) {
    %c0_i32 = arith.constant 0 : i32
    return %arg0, %arg2, %arg1 : i32, i32, i32
  }
}

</mosaic_0001>

<llo_original>
// kernel: conv2d_fft_pallas.1
$region0: #{conv2d_fft_pallas.1}
  #allocation0 [shape = 'u32[]', space=smem, size = 0x4, offset = 0x4, fixed_abs, tag = 'smem constant byte address 0x4 - core index']
  #allocation1 [shape = 'u32[144,128]{1,0:T(1,128)}', space=vmem, size = 0x12000, scoped, tag = 'internal scratch']
  #allocation2 [shape = 'bf16[7,16,36]{2,1,0:T(16,128)(2,1)}', space=vmem, size = 0x7000, scoped, tag = 'scratch operand']
  %s0 = inlined_call_operand.vmem [shape: bf16[8,2,7,17,4], index: 0, kind: input, shape index: {}]
  %s1 = inlined_call_operand.vmem [shape: bf16[36,128], index: 1, kind: input, shape index: {}]
  %s2 = inlined_call_operand.vmem [shape: f32[1,128], index: 2, kind: input, shape index: {}]
  %s3 = inlined_call_operand.vmem [shape: f32[2,112,128], index: 3, kind: output, shape index: {}]
  %s4 = sld [smem:[#allocation0]]
  $region86: #{conv2d_fft_pallas.1} parent=0
    _
  %s6 = ssub.s32 1, %s4
  %s7 = scalar_select 0, %s6, %s4
  $region1: #{conv2d_fft_pallas.1} parent=0
    #allocation3 [shape = 'u8[688128]{0}', space=vmem, size = 0xa8000, scoped, tag = 'input window, operand 0']
    loop: start=0, step=1, limit=4
    $region2: #{conv2d_fft_pallas.1} parent=1 // loop_pre_header
      _
    $region3: #{conv2d_fft_pallas.1} parent=1 // loop_header
      %s9 = sphi 0, %s13
      %p10 = scmp.ge.s32.totalorder %s9, 4
      %s16 = sphi 0, %s35
      %s17 = sphi 0, %s31
      %s18 = sphi 0, %s27
      %s19 = sphi 0, %s16
      %s20 = sphi 0, %s17
      %s21 = sphi 0, %s18
      %s22 = sphi 0, %s19
      %s23 = sphi 0, %s20
      %s24 = sphi 0, %s21
      %s40 = sphi 0, %s42
      %s43 = sphi 0, %s40
      %s44 = sphi 0, %s43
      %s60 = sphi 0, %s44
      %s66 = sphi 0, %s68
      %s69 = sphi 0, %s66
      %s70 = sphi 0, %s69
      %s86 = sphi 0, %s70
      %s92 = sphi 0, %s94
      %s95 = sphi 0, %s92
      %s96 = sphi 0, %s95
      %s112 = sphi 0, %s96
      %s122 = sphi 0, %s124
      %s125 = sphi 0, %s122
      %s126 = sphi 0, %s125
      %s142 = sphi 0, %s126
    $region4: #{conv2d_fft_pallas.1} parent=1 // loop_header_branch
      %12 = sbr.rel (%p10) target = $region8
    $region5: #{conv2d_fft_pallas.1} parent=1 // loop_body
      %s14 = ssub.s32 %s9, 1
      %s15 = ssub.s32 %s9, 2
      %s25 = sadd.s32 1, %s18
      %p26 = scmp.ge.s32.totalorder %s25, 1
      %s27 = scalar_select %p26, 0, %s25
      %s28 = sadd.s32 1, %s17
      %s29 = scalar_select %p26, %s28, %s17
      %p30 = scmp.ge.s32.totalorder %s29, 1
      %s31 = scalar_select %p30, 0, %s29
      %s32 = sadd.s32 1, %s16
      %s33 = scalar_select %p30, %s32, %s16
      %p34 = scmp.ge.s32.totalorder %s33, 2
      %s35 = scalar_select %p34, 0, %s33
      %s36 = ssub.s32 %s16, %s35
      %s37 = ssub.s32 %s18, %s27
      %s38 = sor.u32 %s36, %s37
      %p39 = scmp.eq.s32.totalorder %s38, 0
      %s41 = sadd.s32 %s40, 1
      %s42 = scalar_select %p39, %s40, %s41
      %p45 = pneg %p39
      %p46 = scmp.eq.s32.totalorder %s9, 1
      %p47 = por %p45, %p46
      %p48 = scmp.ne.s32.totalorder %s40, %s43
      %p49 = scmp.eq.s32.totalorder %s9, 0
      %p50 = por %p48, %p49
      %p51 = scmp.ne.s32.totalorder %s40, %s43
      %p52 = scmp.eq.s32.totalorder %s14, 1
      %p53 = por %p51, %p52
      %p54 = scmp.ne.s32.totalorder %s43, %s44
      %p55 = scmp.eq.s32.totalorder %s14, 0
      %p56 = por %p54, %p55
      %p57 = scmp.ne.s32.totalorder %s43, %s44
      %p58 = scmp.eq.s32.totalorder %s15, 1
      %p59 = por %p57, %p58
      %p61 = scmp.ne.s32.totalorder %s44, %s60
      %p62 = scmp.eq.s32.totalorder %s15, 0
      %p63 = por %p61, %p62
      %s64 = ssub.s32 %s17, %s31
      %p65 = scmp.eq.s32.totalorder %s64, 0
      %s67 = sadd.s32 %s66, 1
      %s68 = scalar_select %p65, %s66, %s67
      %p71 = pneg %p65
      %p72 = scmp.eq.s32.totalorder %s9, 1
      %p73 = por %p71, %p72
      %p74 = scmp.ne.s32.totalorder %s66, %s69
      %p75 = scmp.eq.s32.totalorder %s9, 0
      %p76 = por %p74, %p75
      %p77 = scmp.ne.s32.totalorder %s66, %s69
      %p78 = scmp.eq.s32.totalorder %s14, 1
      %p79 = por %p77, %p78
      %p80 = scmp.ne.s32.totalorder %s69, %s70
      %p81 = scmp.eq.s32.totalorder %s14, 0
      %p82 = por %p80, %p81
      %p83 = scmp.ne.s32.totalorder %s69, %s70
      %p84 = scmp.eq.s32.totalorder %s15, 1
      %p85 = por %p83, %p84
      %p87 = scmp.ne.s32.totalorder %s70, %s86
      %p88 = scmp.eq.s32.totalorder %s15, 0
      %p89 = por %p87, %p88
      %s90 = ssub.s32 %s17, %s31
      %p91 = scmp.eq.s32.totalorder %s90, 0
      %s93 = sadd.s32 %s92, 1
      %s94 = scalar_select %p91, %s92, %s93
      %p97 = pneg %p91
      %p98 = scmp.eq.s32.totalorder %s9, 1
      %p99 = por %p97, %p98
      %p100 = scmp.ne.s32.totalorder %s92, %s95
      %p101 = scmp.eq.s32.totalorder %s9, 0
      %p102 = por %p100, %p101
      %p103 = scmp.ne.s32.totalorder %s92, %s95
      %p104 = scmp.eq.s32.totalorder %s14, 1
      %p105 = por %p103, %p104
      %p106 = scmp.ne.s32.totalorder %s95, %s96
      %p107 = scmp.eq.s32.totalorder %s14, 0
      %p108 = por %p106, %p107
      %p109 = scmp.ne.s32.totalorder %s95, %s96
      %p110 = scmp.eq.s32.totalorder %s15, 1
      %p111 = por %p109, %p110
      %p113 = scmp.ne.s32.totalorder %s96, %s112
      %p114 = scmp.eq.s32.totalorder %s15, 0
      %p115 = por %p113, %p114
      %s116 = ssub.s32 %s16, %s35
      %s117 = ssub.s32 %s18, %s27
      %s118 = sor.u32 %s116, %s117
      %s119 = ssub.s32 %s17, %s31
      %s120 = sor.u32 %s118, %s119
      %p121 = scmp.eq.s32.totalorder %s120, 0
      %s123 = sadd.s32 %s122, 1
      %s124 = scalar_select %p121, %s122, %s123
      %p127 = pneg %p121
      %p128 = scmp.eq.s32.totalorder %s9, 1
      %p129 = por %p127, %p128
      %p130 = scmp.ne.s32.totalorder %s122, %s125
      %p131 = scmp.eq.s32.totalorder %s9, 0
      %p132 = por %p130, %p131
      %p133 = scmp.ne.s32.totalorder %s122, %s125
      %p134 = scmp.eq.s32.totalorder %s14, 1
      %p135 = por %p133, %p134
      %p136 = scmp.ne.s32.totalorder %s125, %s126
      %p137 = scmp.eq.s32.totalorder %s14, 0
      %p138 = por %p136, %p137
      %p139 = scmp.ne.s32.totalorder %s125, %s126
      %p140 = scmp.eq.s32.totalorder %s15, 1
      %p141 = por %p139, %p140
      %p143 = scmp.ne.s32.totalorder %s126, %s142
      %p144 = scmp.eq.s32.totalorder %s15, 0
      %p145 = por %p143, %p144
      %p146 = scmp.le.s32.totalorder 1, %s9
      %p147 = scmp.lt.s32.totalorder %s9, 3
      %p148 = pnand %p146, %p147
      %p149 = pneg %p148
      // Predicated region
      $region9: #{conv2d_fft_pallas.1} parent=5 // pred_check
        _
      $region10: #{conv2d_fft_pallas.1} parent=5 // pred_check_branch
        %151 = sbr.rel (%p148) target = $region12
      $region11: #{conv2d_fft_pallas.1} parent=5 // pred_region
        %s152 = ssub.s32 %s9, 1
        // Predicated region
        $region13: #{conv2d_fft_pallas.1} parent=11 // pred_check
          %p153 = pneg %p82
        $region14: #{conv2d_fft_pallas.1} parent=11 // pred_check_branch
          %155 = sbr.rel (%p153) target = $region16
        $region15: #{conv2d_fft_pallas.1} parent=11 // pred_region
          %p156 = scmp.lt.s32.totalorder %s20, 0
          %s157 = scalar_select %p156, %s20, 0
          %s158 = smul.addr %s157, 4
          %s159 = scalar_lea.vmem %s1, %s158
        $region16: #{conv2d_fft_pallas.1} parent=11 // pred_fallthru
          _
        // Predicated region
        $region17: #{conv2d_fft_pallas.1} parent=11 // pred_check
          %p160 = pneg %p108
        $region18: #{conv2d_fft_pallas.1} parent=11 // pred_check_branch
          %162 = sbr.rel (%p160) target = $region20
        $region19: #{conv2d_fft_pallas.1} parent=11 // pred_region
          %p163 = scmp.lt.s32.totalorder %s20, 0
          %s164 = scalar_select %p163, %s20, 0
          %s165 = scalar_lea.vmem %s2, %s164
        $region20: #{conv2d_fft_pallas.1} parent=11 // pred_fallthru
          _
      $region12: #{conv2d_fft_pallas.1} parent=5 // pred_fallthru
        _
      %p166 = scmp.lt.s32.totalorder %s9, 2
      // Predicated region
      $region21: #{conv2d_fft_pallas.1} parent=5 // pred_check
        %p167 = pneg %p166
      $region22: #{conv2d_fft_pallas.1} parent=5 // pred_check_branch
        %169 = sbr.rel (%p167) target = $region24
      $region23: #{conv2d_fft_pallas.1} parent=5 // pred_region
        // Predicated region
        $region25: #{conv2d_fft_pallas.1} parent=23 // pred_check
          %p170 = pneg %p50
        $region26: #{conv2d_fft_pallas.1} parent=23 // pred_check_branch
          %172 = sbr.rel (%p170) target = $region28
        $region27: #{conv2d_fft_pallas.1} parent=23 // pred_region
          %s173 = sand.u32 %s40, 1
          %s174 = sand.u32 %s40, 1
          %s175 = smul.addr %s174, 672
          %s176 = scalar_lea.vmem [#allocation3], %s175
          %s177 = smul.u32 7, %s18
          %s178 = smul.addr %s177, 3
          %s179 = smul.addr %s16, 21
          %s180 = sadd.s32 %s178, %s179
          %s181 = smul.addr %s180, 4
          %s182 = scalar_lea.vmem %s0, %s181
          // Predicated region
          $region29: #{conv2d_fft_pallas.1} parent=27 // pred_check
            _
          $region30: #{conv2d_fft_pallas.1} parent=27 // pred_check_branch
            %184 = sbr.rel (0) target = $region32
          $region31: #{conv2d_fft_pallas.1} parent=27 // pred_region
            // Predicated region
            $region33: #{conv2d_fft_pallas.1} parent=31 // pred_check
              _
            $region34: #{conv2d_fft_pallas.1} parent=31 // pred_check_branch
              %186 = sbr.rel target = $region36
            $region35: #{conv2d_fft_pallas.1} parent=31 // pred_region
              // Predicated region
              $region48: #{conv2d_fft_pallas.1} parent=35 // pred_check
                _
              $region49: #{conv2d_fft_pallas.1} parent=35 // pred_check_branch
                %535 = sbr.rel (0) target = $region51
              $region50: #{conv2d_fft_pallas.1} parent=35 // pred_region
                loop: start=0, step=1, limit=1
                $region52: #{conv2d_fft_pallas.1} parent=50 // loop_pre_header
                  _
                $region53: #{conv2d_fft_pallas.1} parent=50 // loop_header
                  %s537 = sphi 0, %s541
                  %p538 = scmp.ge.s32.totalorder %s537, 1
                  %s542 = sphi %s182, %s182
                  %s543 = sphi %s176, %s176
                $region54: #{conv2d_fft_pallas.1} parent=50 // loop_header_branch
                  %540 = sbr.rel (%p538) target = $region58
                $region55: #{conv2d_fft_pallas.1} parent=50 // loop_body
                  _
                $region56: #{conv2d_fft_pallas.1} parent=50 // loop_footer
                  %s541 = sadd.s32 1, %s537
                $region57: #{conv2d_fft_pallas.1} parent=50 // loop_footer_branch
                  %536 = sbr.rel target = $region53
                $region58: #{conv2d_fft_pallas.1} parent=50 // loop_exit
                  _
                loop: start=0, step=1, limit=1
                $region59: #{conv2d_fft_pallas.1} parent=50 // loop_pre_header
                  _
                $region60: #{conv2d_fft_pallas.1} parent=50 // loop_header
                  %s546 = sphi 0, %s550
                  %p547 = scmp.ge.s32.totalorder %s546, 1
                  %s551 = sphi %s182, %s182
                  %s552 = sphi %s176, %s176
                $region61: #{conv2d_fft_pallas.1} parent=50 // loop_header_branch
                  %549 = sbr.rel (%p547) target = $region65
                $region62: #{conv2d_fft_pallas.1} parent=50 // loop_body
                  %v553 = vld [vmem:[%s551] sm:$0xf]
                  %554 = vst [vmem:[%s552] sm:$0xf] %v553
                  %v555 = vld [vmem:[%s551 + $0x4] sm:$0xf]
                  %556 = vst [vmem:[%s552 + $0x4] sm:$0xf] %v555
                  %v557 = vld [vmem:[%s551 + $0x8] sm:$0xf]
                  %558 = vst [vmem:[%s552 + $0x8] sm:$0xf] %v557
                  %v559 = vld [vmem:[%s551 + $0xc] sm:$0xf]
                  %560 = vst [vmem:[%s552 + $0xc] sm:$0xf] %v559
                  %v561 = vld [vmem:[%s551 + $0x10] sm:$0xf]
                  %562 = vst [vmem:[%s552 + $0x10] sm:$0xf] %v561
                  %v563 = vld [vmem:[%s551 + $0x14] sm:$0xf]
                  %564 = vst [vmem:[%s552 + $0x14] sm:$0xf] %v563
                  %v565 = vld [vmem:[%s551 + $0x18] sm:$0xf]
                  %566 = vst [vmem:[%s552 + $0x18] sm:$0xf] %v565
                  %v567 = vld [vmem:[%s551 + $0x1c] sm:$0xf]
                  %568 = vst [vmem:[%s552 + $0x1c] sm:$0xf] %v567
                  %v569 = vld [vmem:[%s551 + $0x20] sm:$0xf]
                  %570 = vst [vmem:[%s552 + $0x20] sm:$0xf] %v569
                  %v571 = vld [vmem:[%s551 + $0x24] sm:$0xf]
                  %572 = vst [vmem:[%s552 + $0x24] sm:$0xf] %v571
                  %v573 = vld [vmem:[%s551 + $0x28] sm:$0xf]
                  %574 = vst [vmem:[%s552 + $0x28] sm:$0xf] %v573
                  %v575 = vld [vmem:[%s551 + $0x2c] sm:$0xf]
                  %576 = vst [vmem:[%s552 + $0x2c] sm:$0xf] %v575
                  %v577 = vld [vmem:[%s551 + $0x30] sm:$0xf]
                  %578 = vst [vmem:[%s552 + $0x30] sm:$0xf] %v577
                  %v579 = vld [vmem:[%s551 + $0x34] sm:$0xf]
                  %580 = vst [vmem:[%s552 + $0x34] sm:$0xf] %v579
                  %v581 = vld [vmem:[%s551 + $0x38] sm:$0xf]
                  %582 = vst [vmem:[%s552 + $0x38] sm:$0xf] %v581
                  %v583 = vld [vmem:[%s551 + $0x3c] sm:$0xf]
                  %584 = vst [vmem:[%s552 + $0x3c] sm:$0xf] %v583
                  %v585 = vld [vmem:[%s551 + $0x40] sm:$0xf]
                  %586 = vst [vmem:[%s552 + $0x40] sm:$0xf] %v585
                  %v587 = vld [vmem:[%s551 + $0x44] sm:$0xf]
                  %588 = vst [vmem:[%s552 + $0x44] sm:$0xf] %v587
                  %v589 = vld [vmem:[%s551 + $0x48] sm:$0xf]
                  %590 = vst [vmem:[%s552 + $0x48] sm:$0xf] %v589
                  %v591 = vld [vmem:[%s551 + $0x4c] sm:$0xf]
                  %592 = vst [vmem:[%s552 + $0x4c] sm:$0xf] %v591
                  %v593 = vld [vmem:[%s551 + $0x50] sm:$0xf]
                  %594 = vst [vmem:[%s552 + $0x50] sm:$0xf] %v593
                  %v595 = vld [vmem:[%s551 + $0xa8] sm:$0xf]
                  %596 = vst [vmem:[%s552 + $0x54] sm:$0xf] %v595
                  %v597 = vld [vmem:[%s551 + $0xac] sm:$0xf]
                  %598 = vst [vmem:[%s552 + $0x58] sm:$0xf] %v597
                  %v599 = vld [vmem:[%s551 + $0xb0] sm:$0xf]
                  %600 = vst [vmem:[%s552 + $0x5c] sm:$0xf] %v599
                  %v601 = vld [vmem:[%s551 + $0xb4] sm:$0xf]
                  %602 = vst [vmem:[%s552 + $0x60] sm:$0xf] %v601
                  %v603 = vld [vmem:[%s551 + $0xb8] sm:$0xf]
                  %604 = vst [vmem:[%s552 + $0x64] sm:$0xf] %v603
                  %v605 = vld [vmem:[%s551 + $0xbc] sm:$0xf]
                  %606 = vst [vmem:[%s552 + $0x68] sm:$0xf] %v605
                  %v607 = vld [vmem:[%s551 + $0xc0] sm:$0xf]
                  %608 = vst [vmem:[%s552 + $0x6c] sm:$0xf] %v607
                  %v609 = vld [vmem:[%s551 + $0xc4] sm:$0xf]
                  %610 = vst [vmem:[%s552 + $0x70] sm:$0xf] %v609
                  %v611 = vld [vmem:[%s551 + $0xc8] sm:$0xf]
                  %612 = vst [vmem:[%s552 + $0x74] sm:$0xf] %v611
                  %v613 = vld [vmem:[%s551 + $0xcc] sm:$0xf]
                  %614 = vst [vmem:[%s552 + $0x78] sm:$0xf] %v613
                  %v615 = vld [vmem:[%s551 + $0xd0] sm:$0xf]
                  %616 = vst [vmem:[%s552 + $0x7c] sm:$0xf] %v615
                  %v617 = vld [vmem:[%s551 + $0xd4] sm:$0xf]
                  %618 = vst [vmem:[%s552 + $0x80] sm:$0xf] %v617
                  %v619 = vld [vmem:[%s551 + $0xd8] sm:$0xf]
                  %620 = vst [vmem:[%s552 + $0x84] sm:$0xf] %v619
                  %v621 = vld [vmem:[%s551 + $0xdc] sm:$0xf]
                  %622 = vst [vmem:[%s552 + $0x88] sm:$0xf] %v621
                  %v623 = vld [vmem:[%s551 + $0xe0] sm:$0xf]
                  %624 = vst [vmem:[%s552 + $0x8c] sm:$0xf] %v623
                  %v625 = vld [vmem:[%s551 + $0xe4] sm:$0xf]
                  %626 = vst [vmem:[%s552 + $0x90] sm:$0xf] %v625
                  %v627 = vld [vmem:[%s551 + $0xe8] sm:$0xf]
                  %628 = vst [vmem:[%s552 + $0x94] sm:$0xf] %v627
                  %v629 = vld [vmem:[%s551 + $0xec] sm:$0xf]
                  %630 = vst [vmem:[%s552 + $0x98] sm:$0xf] %v629
                  %v631 = vld [vmem:[%s551 + $0xf0] sm:$0xf]
                  %632 = vst [vmem:[%s552 + $0x9c] sm:$0xf] %v631
                  %v633 = vld [vmem:[%s551 + $0xf4] sm:$0xf]
                  %634 = vst [vmem:[%s552 + $0xa0] sm:$0xf] %v633
                  %v635 = vld [vmem:[%s551 + $0xf8] sm:$0xf]
                  %636 = vst [vmem:[%s552 + $0xa4] sm:$0xf] %v635
                  %v637 = vld [vmem:[%s551 + $0x150] sm:$0xf]
                  %638 = vst [vmem:[%s552 + $0xa8] sm:$0xf] %v637
                  %v639 = vld [vmem:[%s551 + $0x154] sm:$0xf]
                  %640 = vst [vmem:[%s552 + $0xac] sm:$0xf] %v639
                  %v641 = vld [vmem:[%s551 + $0x158] sm:$0xf]
                  %642 = vst [vmem:[%s552 + $0xb0] sm:$0xf] %v641
                  %v643 = vld [vmem:[%s551 + $0x15c] sm:$0xf]
                  %644 = vst [vmem:[%s552 + $0xb4] sm:$0xf] %v643
                  %v645 = vld [vmem:[%s551 + $0x160] sm:$0xf]
                  %646 = vst [vmem:[%s552 + $0xb8] sm:$0xf] %v645
                  %v647 = vld [vmem:[%s551 + $0x164] sm:$0xf]
                  %648 = vst [vmem:[%s552 + $0xbc] sm:$0xf] %v647
                  %v649 = vld [vmem:[%s551 + $0x168] sm:$0xf]
                  %650 = vst [vmem:[%s552 + $0xc0] sm:$0xf] %v649
                  %v651 = vld [vmem:[%s551 + $0x16c] sm:$0xf]
                  %652 = vst [vmem:[%s552 + $0xc4] sm:$0xf] %v651
                  %v653 = vld [vmem:[%s551 + $0x170] sm:$0xf]
                  %654 = vst [vmem:[%s552 + $0xc8] sm:$0xf] %v653
                  %v655 = vld [vmem:[%s551 + $0x174] sm:$0xf]
                  %656 = vst [vmem:[%s552 + $0xcc] sm:$0xf] %v655
                  %v657 = vld [vmem:[%s551 + $0x178] sm:$0xf]
                  %658 = vst [vmem:[%s552 + $0xd0] sm:$0xf] %v657
                  %v659 = vld [vmem:[%s551 + $0x17c] sm:$0xf]
                  %660 = vst [vmem:[%s552 + $0xd4] sm:$0xf] %v659
                  %v661 = vld [vmem:[%s551 + $0x180] sm:$0xf]
                  %662 = vst [vmem:[%s552 + $0xd8] sm:$0xf] %v661
                  %v663 = vld [vmem:[%s551 + $0x184] sm:$0xf]
                  %664 = vst [vmem:[%s552 + $0xdc] sm:$0xf] %v663
                  %v665 = vld [vmem:[%s551 + $0x188] sm:$0xf]
                  %666 = vst [vmem:[%s552 + $0xe0] sm:$0xf] %v665
                  %v667 = vld [vmem:[%s551 + $0x18c] sm:$0xf]
                  %668 = vst [vmem:[%s552 + $0xe4] sm:$0xf] %v667
                  %v669 = vld [vmem:[%s551 + $0x190] sm:$0xf]
                  %670 = vst [vmem:[%s552 + $0xe8] sm:$0xf] %v669
                  %v671 = vld [vmem:[%s551 + $0x194] sm:$0xf]
                  %672 = vst [vmem:[%s552 + $0xec] sm:$0xf] %v671
                  %v673 = vld [vmem:[%s551 + $0x198] sm:$0xf]
                  %674 = vst [vmem:[%s552 + $0xf0] sm:$0xf] %v673
                  %v675 = vld [vmem:[%s551 + $0x19c] sm:$0xf]
                  %676 = vst [vmem:[%s552 + $0xf4] sm:$0xf] %v675
                  %v677 = vld [vmem:[%s551 + $0x1a0] sm:$0xf]
                  %678 = vst [vmem:[%s552 + $0xf8] sm:$0xf] %v677
                  %v679 = vld [vmem:[%s551 + $0x1f8] sm:$0xf]
                  %680 = vst [vmem:[%s552 + $0xfc] sm:$0xf] %v679
                  %v681 = vld [vmem:[%s551 + $0x1fc] sm:$0xf]
                  %682 = vst [vmem:[%s552 + $0x100] sm:$0xf] %v681
                  %v683 = vld [vmem:[%s551 + $0x200] sm:$0xf]
                  %684 = vst [vmem:[%s552 + $0x104] sm:$0xf] %v683
                  %v685 = vld [vmem:[%s551 + $0x204] sm:$0xf]
                  %686 = vst [vmem:[%s552 + $0x108] sm:$0xf] %v685
                  %v687 = vld [vmem:[%s551 + $0x208] sm:$0xf]
                  %688 = vst [vmem:[%s552 + $0x10c] sm:$0xf] %v687
                  %v689 = vld [vmem:[%s551 + $0x20c] sm:$0xf]
                  %690 = vst [vmem:[%s552 + $0x110] sm:$0xf] %v689
                  %v691 = vld [vmem:[%s551 + $0x210] sm:$0xf]
                  %692 = vst [vmem:[%s552 + $0x114] sm:$0xf] %v691
                  %v693 = vld [vmem:[%s551 + $0x214] sm:$0xf]
                  %694 = vst [vmem:[%s552 + $0x118] sm:$0xf] %v693
                  %v695 = vld [vmem:[%s551 + $0x218] sm:$0xf]
                  %696 = vst [vmem:[%s552 + $0x11c] sm:$0xf] %v695
                  %v697 = vld [vmem:[%s551 + $0x21c] sm:$0xf]
                  %698 = vst [vmem:[%s552 + $0x120] sm:$0xf] %v697
                  %v699 = vld [vmem:[%s551 + $0x220] sm:$0xf]
                  %700 = vst [vmem:[%s552 + $0x124] sm:$0xf] %v699
                  %v701 = vld [vmem:[%s551 + $0x224] sm:$0xf]
                  %702 = vst [vmem:[%s552 + $0x128] sm:$0xf] %v701
                  %v703 = vld [vmem:[%s551 + $0x228] sm:$0xf]
                  %704 = vst [vmem:[%s552 + $0x12c] sm:$0xf] %v703
                  %v705 = vld [vmem:[%s551 + $0x22c] sm:$0xf]
                  %706 = vst [vmem:[%s552 + $0x130] sm:$0xf] %v705
                  %v707 = vld [vmem:[%s551 + $0x230] sm:$0xf]
                  %708 = vst [vmem:[%s552 + $0x134] sm:$0xf] %v707
                  %v709 = vld [vmem:[%s551 + $0x234] sm:$0xf]
                  %710 = vst [vmem:[%s552 + $0x138] sm:$0xf] %v709
                  %v711 = vld [vmem:[%s551 + $0x238] sm:$0xf]
                  %712 = vst [vmem:[%s552 + $0x13c] sm:$0xf] %v711
                  %v713 = vld [vmem:[%s551 + $0x23c] sm:$0xf]
                  %714 = vst [vmem:[%s552 + $0x140] sm:$0xf] %v713
                  %v715 = vld [vmem:[%s551 + $0x240] sm:$0xf]
                  %716 = vst [vmem:[%s552 + $0x144] sm:$0xf] %v715
                  %v717 = vld [vmem:[%s551 + $0x244] sm:$0xf]
                  %718 = vst [vmem:[%s552 + $0x148] sm:$0xf] %v717
                  %v719 = vld [vmem:[%s551 + $0x248] sm:$0xf]
                  %720 = vst [vmem:[%s552 + $0x14c] sm:$0xf] %v719
                  %v721 = vld [vmem:[%s551 + $0x2a0] sm:$0xf]
                  %722 = vst [vmem:[%s552 + $0x150] sm:$0xf] %v721
                  %v723 = vld [vmem:[%s551 + $0x2a4] sm:$0xf]
                  %724 = vst [vmem:[%s552 + $0x154] sm:$0xf] %v723
                  %v725 = vld [vmem:[%s551 + $0x2a8] sm:$0xf]
                  %726 = vst [vmem:[%s552 + $0x158] sm:$0xf] %v725
                  %v727 = vld [vmem:[%s551 + $0x2ac] sm:$0xf]
                  %728 = vst [vmem:[%s552 + $0x15c] sm:$0xf] %v727
                  %v729 = vld [vmem:[%s551 + $0x2b0] sm:$0xf]
                  %730 = vst [vmem:[%s552 + $0x160] sm:$0xf] %v729
                  %v731 = vld [vmem:[%s551 + $0x2b4] sm:$0xf]
                  %732 = vst [vmem:[%s552 + $0x164] sm:$0xf] %v731
                  %v733 = vld [vmem:[%s551 + $0x2b8] sm:$0xf]
                  %734 = vst [vmem:[%s552 + $0x168] sm:$0xf] %v733
                  %v735 = vld [vmem:[%s551 + $0x2bc] sm:$0xf]
                  %736 = vst [vmem:[%s552 + $0x16c] sm:$0xf] %v735
                  %v737 = vld [vmem:[%s551 + $0x2c0] sm:$0xf]
                  %738 = vst [vmem:[%s552 + $0x170] sm:$0xf] %v737
                  %v739 = vld [vmem:[%s551 + $0x2c4] sm:$0xf]
                  %740 = vst [vmem:[%s552 + $0x174] sm:$0xf] %v739
                  %v741 = vld [vmem:[%s551 + $0x2c8] sm:$0xf]
                  %742 = vst [vmem:[%s552 + $0x178] sm:$0xf] %v741
                  %v743 = vld [vmem:[%s551 + $0x2cc] sm:$0xf]
                  %744 = vst [vmem:[%s552 + $0x17c] sm:$0xf] %v743
                  %v745 = vld [vmem:[%s551 + $0x2d0] sm:$0xf]
                  %746 = vst [vmem:[%s552 + $0x180] sm:$0xf] %v745
                  %v747 = vld [vmem:[%s551 + $0x2d4] sm:$0xf]
                  %748 = vst [vmem:[%s552 + $0x184] sm:$0xf] %v747
                  %v749 = vld [vmem:[%s551 + $0x2d8] sm:$0xf]
                  %750 = vst [vmem:[%s552 + $0x188] sm:$0xf] %v749
                  %v751 = vld [vmem:[%s551 + $0x2dc] sm:$0xf]
                  %752 = vst [vmem:[%s552 + $0x18c] sm:$0xf] %v751
                  %v753 = vld [vmem:[%s551 + $0x2e0] sm:$0xf]
                  %754 = vst [vmem:[%s552 + $0x190] sm:$0xf] %v753
                  %v755 = vld [vmem:[%s551 + $0x2e4] sm:$0xf]
                  %756 = vst [vmem:[%s552 + $0x194] sm:$0xf] %v755
                  %v757 = vld [vmem:[%s551 + $0x2e8] sm:$0xf]
                  %758 = vst [vmem:[%s552 + $0x198] sm:$0xf] %v757
                  %v759 = vld [vmem:[%s551 + $0x2ec] sm:$0xf]
                  %760 = vst [vmem:[%s552 + $0x19c] sm:$0xf] %v759
                  %v761 = vld [vmem:[%s551 + $0x2f0] sm:$0xf]
                  %762 = vst [vmem:[%s552 + $0x1a0] sm:$0xf] %v761
                  %v763 = vld [vmem:[%s551 + $0x348] sm:$0xf]
                  %764 = vst [vmem:[%s552 + $0x1a4] sm:$0xf] %v763
                  %v765 = vld [vmem:[%s551 + $0x34c] sm:$0xf]
                  %766 = vst [vmem:[%s552 + $0x1a8] sm:$0xf] %v765
                  %v767 = vld [vmem:[%s551 + $0x350] sm:$0xf]
                  %768 = vst [vmem:[%s552 + $0x1ac] sm:$0xf] %v767
                  %v769 = vld [vmem:[%s551 + $0x354] sm:$0xf]
                  %770 = vst [vmem:[%s552 + $0x1b0] sm:$0xf] %v769
                  %v771 = vld [vmem:[%s551 + $0x358] sm:$0xf]
                  %772 = vst [vmem:[%s552 + $0x1b4] sm:$0xf] %v771
                  %v773 = vld [vmem:[%s551 + $0x35c] sm:$0xf]
                  %774 = vst [vmem:[%s552 + $0x1b8] sm:$0xf] %v773
                  %v775 = vld [vmem:[%s551 + $0x360] sm:$0xf]
                  %776 = vst [vmem:[%s552 + $0x1bc] sm:$0xf] %v775
                  %v777 = vld [vmem:[%s551 + $0x364] sm:$0xf]
                  %778 = vst [vmem:[%s552 + $0x1c0] sm:$0xf] %v777
                  %v779 = vld [vmem:[%s551 + $0x368] sm:$0xf]
                  %780 = vst [vmem:[%s552 + $0x1c4] sm:$0xf] %v779
                  %v781 = vld [vmem:[%s551 + $0x36c] sm:$0xf]
                  %782 = vst [vmem:[%s552 + $0x1c8] sm:$0xf] %v781
                  %v783 = vld [vmem:[%s551 + $0x370] sm:$0xf]
                  %784 = vst [vmem:[%s552 + $0x1cc] sm:$0xf] %v783
                  %v785 = vld [vmem:[%s551 + $0x374] sm:$0xf]
                  %786 = vst [vmem:[%s552 + $0x1d0] sm:$0xf] %v785
                  %v787 = vld [vmem:[%s551 + $0x378] sm:$0xf]
                  %788 = vst [vmem:[%s552 + $0x1d4] sm:$0xf] %v787
                  %v789 = vld [vmem:[%s551 + $0x37c] sm:$0xf]
                  %790 = vst [vmem:[%s552 + $0x1d8] sm:$0xf] %v789
                  %v791 = vld [vmem:[%s551 + $0x380] sm:$0xf]
                  %792 = vst [vmem:[%s552 + $0x1dc] sm:$0xf] %v791
                  %v793 = vld [vmem:[%s551 + $0x384] sm:$0xf]
                  %794 = vst [vmem:[%s552 + $0x1e0] sm:$0xf] %v793
                  %v795 = vld [vmem:[%s551 + $0x388] sm:$0xf]
                  %796 = vst [vmem:[%s552 + $0x1e4] sm:$0xf] %v795
                  %v797 = vld [vmem:[%s551 + $0x38c] sm:$0xf]
                  %798 = vst [vmem:[%s552 + $0x1e8] sm:$0xf] %v797
                  %v799 = vld [vmem:[%s551 + $0x390] sm:$0xf]
                  %800 = vst [vmem:[%s552 + $0x1ec] sm:$0xf] %v799
                  %v801 = vld [vmem:[%s551 + $0x394] sm:$0xf]
                  %802 = vst [vmem:[%s552 + $0x1f0] sm:$0xf] %v801
                  %v803 = vld [vmem:[%s551 + $0x398] sm:$0xf]
                  %804 = vst [vmem:[%s552 + $0x1f4] sm:$0xf] %v803
                  %v805 = vld [vmem:[%s551 + $0x3f0] sm:$0xf]
                  %806 = vst [vmem:[%s552 + $0x1f8] sm:$0xf] %v805
                  %v807 = vld [vmem:[%s551 + $0x3f4] sm:$0xf]
                  %808 = vst [vmem:[%s552 + $0x1fc] sm:$0xf] %v807
                  %v809 = vld [vmem:[%s551 + $0x3f8] sm:$0xf]
                  %810 = vst [vmem:[%s552 + $0x200] sm:$0xf] %v809
                  %v811 = vld [vmem:[%s551 + $0x3fc] sm:$0xf]
                  %812 = vst [vmem:[%s552 + $0x204] sm:$0xf] %v811
                  %v813 = vld [vmem:[%s551 + $0x400] sm:$0xf]
                  %814 = vst [vmem:[%s552 + $0x208] sm:$0xf] %v813
                  %v815 = vld [vmem:[%s551 + $0x404] sm:$0xf]
                  %816 = vst [vmem:[%s552 + $0x20c] sm:$0xf] %v815
                  %v817 = vld [vmem:[%s551 + $0x408] sm:$0xf]
                  %818 = vst [vmem:[%s552 + $0x210] sm:$0xf] %v817
                  %v819 = vld [vmem:[%s551 + $0x40c] sm:$0xf]
                  %820 = vst [vmem:[%s552 + $0x214] sm:$0xf] %v819
                  %v821 = vld [vmem:[%s551 + $0x410] sm:$0xf]
                  %822 = vst [vmem:[%s552 + $0x218] sm:$0xf] %v821
                  %v823 = vld [vmem:[%s551 + $0x414] sm:$0xf]
                  %824 = vst [vmem:[%s552 + $0x21c] sm:$0xf] %v823
                  %v825 = vld [vmem:[%s551 + $0x418] sm:$0xf]
                  %826 = vst [vmem:[%s552 + $0x220] sm:$0xf] %v825
                  %v827 = vld [vmem:[%s551 + $0x41c] sm:$0xf]
                  %828 = vst [vmem:[%s552 + $0x224] sm:$0xf] %v827
                  %v829 = vld [vmem:[%s551 + $0x420] sm:$0xf]
                  %830 = vst [vmem:[%s552 + $0x228] sm:$0xf] %v829
                  %v831 = vld [vmem:[%s551 + $0x424] sm:$0xf]
                  %832 = vst [vmem:[%s552 + $0x22c] sm:$0xf] %v831
                  %v833 = vld [vmem:[%s551 + $0x428] sm:$0xf]
                  %834 = vst [vmem:[%s552 + $0x230] sm:$0xf] %v833
                  %v835 = vld [vmem:[%s551 + $0x42c] sm:$0xf]
                  %836 = vst [vmem:[%s552 + $0x234] sm:$0xf] %v835
                  %v837 = vld [vmem:[%s551 + $0x430] sm:$0xf]
                  %838 = vst [vmem:[%s552 + $0x238] sm:$0xf] %v837
                  %v839 = vld [vmem:[%s551 + $0x434] sm:$0xf]
                  %840 = vst [vmem:[%s552 + $0x23c] sm:$0xf] %v839
                  %v841 = vld [vmem:[%s551 + $0x438] sm:$0xf]
                  %842 = vst [vmem:[%s552 + $0x240] sm:$0xf] %v841
                  %v843 = vld [vmem:[%s551 + $0x43c] sm:$0xf]
                  %844 = vst [vmem:[%s552 + $0x244] sm:$0xf] %v843
                  %v845 = vld [vmem:[%s551 + $0x440] sm:$0xf]
                  %846 = vst [vmem:[%s552 + $0x248] sm:$0xf] %v845
                  %v847 = vld [vmem:[%s551 + $0x498] sm:$0xf]
                  %848 = vst [vmem:[%s552 + $0x24c] sm:$0xf] %v847
                  %v849 = vld [vmem:[%s551 + $0x49c] sm:$0xf]
                  %850 = vst [vmem:[%s552 + $0x250] sm:$0xf] %v849
                  %v851 = vld [vmem:[%s551 + $0x4a0] sm:$0xf]
                  %852 = vst [vmem:[%s552 + $0x254] sm:$0xf] %v851
                  %v853 = vld [vmem:[%s551 + $0x4a4] sm:$0xf]
                  %854 = vst [vmem:[%s552 + $0x258] sm:$0xf] %v853
                  %v855 = vld [vmem:[%s551 + $0x4a8] sm:$0xf]
                  %856 = vst [vmem:[%s552 + $0x25c] sm:$0xf] %v855
                  %v857 = vld [vmem:[%s551 + $0x4ac] sm:$0xf]
                  %858 = vst [vmem:[%s552 + $0x260] sm:$0xf] %v857
                  %v859 = vld [vmem:[%s551 + $0x4b0] sm:$0xf]
                  %860 = vst [vmem:[%s552 + $0x264] sm:$0xf] %v859
                  %v861 = vld [vmem:[%s551 + $0x4b4] sm:$0xf]
                  %862 = vst [vmem:[%s552 + $0x268] sm:$0xf] %v861
                  %v863 = vld [vmem:[%s551 + $0x4b8] sm:$0xf]
                  %864 = vst [vmem:[%s552 + $0x26c] sm:$0xf] %v863
                  %v865 = vld [vmem:[%s551 + $0x4bc] sm:$0xf]
                  %866 = vst [vmem:[%s552 + $0x270] sm:$0xf] %v865
                  %v867 = vld [vmem:[%s551 + $0x4c0] sm:$0xf]
                  %868 = vst [vmem:[%s552 + $0x274] sm:$0xf] %v867
                  %v869 = vld [vmem:[%s551 + $0x4c4] sm:$0xf]
                  %870 = vst [vmem:[%s552 + $0x278] sm:$0xf] %v869
                  %v871 = vld [vmem:[%s551 + $0x4c8] sm:$0xf]
                  %872 = vst [vmem:[%s552 + $0x27c] sm:$0xf] %v871
                  %v873 = vld [vmem:[%s551 + $0x4cc] sm:$0xf]
                  %874 = vst [vmem:[%s552 + $0x280] sm:$0xf] %v873
                  %v875 = vld [vmem:[%s551 + $0x4d0] sm:$0xf]
                  %876 = vst [vmem:[%s552 + $0x284] sm:$0xf] %v875
                  %v877 = vld [vmem:[%s551 + $0x4d4] sm:$0xf]
                  %878 = vst [vmem:[%s552 + $0x288] sm:$0xf] %v877
                  %v879 = vld [vmem:[%s551 + $0x4d8] sm:$0xf]
                  %880 = vst [vmem:[%s552 + $0x28c] sm:$0xf] %v879
                  %v881 = vld [vmem:[%s551 + $0x4dc] sm:$0xf]
                  %882 = vst [vmem:[%s552 + $0x290] sm:$0xf] %v881
                  %v883 = vld [vmem:[%s551 + $0x4e0] sm:$0xf]
                  %884 = vst [vmem:[%s552 + $0x294] sm:$0xf] %v883
                  %v885 = vld [vmem:[%s551 + $0x4e4] sm:$0xf]
                  %886 = vst [vmem:[%s552 + $0x298] sm:$0xf] %v885
                  %v887 = vld [vmem:[%s551 + $0x4e8] sm:$0xf]
                  %888 = vst [vmem:[%s552 + $0x29c] sm:$0xf] %v887
                $region63: #{conv2d_fft_pallas.1} parent=50 // loop_footer
                  %s550 = sadd.s32 1, %s546
                $region64: #{conv2d_fft_pallas.1} parent=50 // loop_footer_branch
                  %545 = sbr.rel target = $region60
                $region65: #{conv2d_fft_pallas.1} parent=50 // loop_exit
                  _
              $region51: #{conv2d_fft_pallas.1} parent=35 // pred_fallthru
                _
            $region36: #{conv2d_fft_pallas.1} parent=31 // pred_fallthru
              _
            // Predicated region
            $region37: #{conv2d_fft_pallas.1} parent=31 // pred_check
              _
            $region38: #{conv2d_fft_pallas.1} parent=31 // pred_check_branch
              %188 = sbr.rel (0) target = $region40
            $region39: #{conv2d_fft_pallas.1} parent=31 // pred_region
              loop: start=0, step=1, limit=1
              $region41: #{conv2d_fft_pallas.1} parent=39 // loop_pre_header
                _
              $region42: #{conv2d_fft_pallas.1} parent=39 // loop_header
                %s191 = sphi 0, %s195
                %p192 = scmp.ge.s32.totalorder %s191, 1
                %s196 = sphi %s182, %s182
                %s197 = sphi %s176, %s176
              $region43: #{conv2d_fft_pallas.1} parent=39 // loop_header_branch
                %194 = sbr.rel (%p192) target = $region47
              $region44: #{conv2d_fft_pallas.1} parent=39 // loop_body
                %v198 = vld [vmem:[%s196] sm:$0xf]
                %199 = vst [vmem:[%s197] sm:$0xf] %v198
                %v200 = vld [vmem:[%s196 + $0x4] sm:$0xf]
                %201 = vst [vmem:[%s197 + $0x4] sm:$0xf] %v200
                %v202 = vld [vmem:[%s196 + $0x8] sm:$0xf]
                %203 = vst [vmem:[%s197 + $0x8] sm:$0xf] %v202
                %v204 = vld [vmem:[%s196 + $0xc] sm:$0xf]
                %205 = vst [vmem:[%s197 + $0xc] sm:$0xf] %v204
                %v206 = vld [vmem:[%s196 + $0x10] sm:$0xf]
                %207 = vst [vmem:[%s197 + $0x10] sm:$0xf] %v206
                %v208 = vld [vmem:[%s196 + $0x14] sm:$0xf]
                %209 = vst [vmem:[%s197 + $0x14] sm:$0xf] %v208
                %v210 = vld [vmem:[%s196 + $0x18] sm:$0xf]
                %211 = vst [vmem:[%s197 + $0x18] sm:$0xf] %v210
                %v212 = vld [vmem:[%s196 + $0x1c] sm:$0xf]
                %213 = vst [vmem:[%s197 + $0x1c] sm:$0xf] %v212
                %v214 = vld [vmem:[%s196 + $0x20] sm:$0xf]
                %215 = vst [vmem:[%s197 + $0x20] sm:$0xf] %v214
                %v216 = vld [vmem:[%s196 + $0x24] sm:$0xf]
                %217 = vst [vmem:[%s197 + $0x24] sm:$0xf] %v216
                %v218 = vld [vmem:[%s196 + $0x28] sm:$0xf]
                %219 = vst [vmem:[%s197 + $0x28] sm:$0xf] %v218
                %v220 = vld [vmem:[%s196 + $0x2c] sm:$0xf]
                %221 = vst [vmem:[%s197 + $0x2c] sm:$0xf] %v220
                %v222 = vld [vmem:[%s196 + $0x30] sm:$0xf]
                %223 = vst [vmem:[%s197 + $0x30] sm:$0xf] %v222
                %v224 = vld [vmem:[%s196 + $0x34] sm:$0xf]
                %225 = vst [vmem:[%s197 + $0x34] sm:$0xf] %v224
                %v226 = vld [vmem:[%s196 + $0x38] sm:$0xf]
                %227 = vst [vmem:[%s197 + $0x38] sm:$0xf] %v226
                %v228 = vld [vmem:[%s196 + $0x3c] sm:$0xf]
                %229 = vst [vmem:[%s197 + $0x3c] sm:$0xf] %v228
                %v230 = vld [vmem:[%s196 + $0x40] sm:$0xf]
                %231 = vst [vmem:[%s197 + $0x40] sm:$0xf] %v230
                %v232 = vld [vmem:[%s196 + $0x44] sm:$0xf]
                %233 = vst [vmem:[%s197 + $0x44] sm:$0xf] %v232
                %v234 = vld [vmem:[%s196 + $0x48] sm:$0xf]
                %235 = vst [vmem:[%s197 + $0x48] sm:$0xf] %v234
                %v236 = vld [vmem:[%s196 + $0x4c] sm:$0xf]
                %237 = vst [vmem:[%s197 + $0x4c] sm:$0xf] %v236
                %v238 = vld [vmem:[%s196 + $0x50] sm:$0xf]
                %239 = vst [vmem:[%s197 + $0x50] sm:$0xf] %v238
                %v240 = vld [vmem:[%s196 + $0xa8] sm:$0xf]
                %241 = vst [vmem:[%s197 + $0x54] sm:$0xf] %v240
                %v242 = vld [vmem:[%s196 + $0xac] sm:$0xf]
                %243 = vst [vmem:[%s197 + $0x58] sm:$0xf] %v242
                %v244 = vld [vmem:[%s196 + $0xb0] sm:$0xf]
                %245 = vst [vmem:[%s197 + $0x5c] sm:$0xf] %v244
                %v246 = vld [vmem:[%s196 + $0xb4] sm:$0xf]
                %247 = vst [vmem:[%s197 + $0x60] sm:$0xf] %v246
                %v248 = vld [vmem:[%s196 + $0xb8] sm:$0xf]
                %249 = vst [vmem:[%s197 + $0x64] sm:$0xf] %v248
                %v250 = vld [vmem:[%s196 + $0xbc] sm:$0xf]
                %251 = vst [vmem:[%s197 + $0x68] sm:$0xf] %v250
                %v252 = vld [vmem:[%s196 + $0xc0] sm:$0xf]
                %253 = vst [vmem:[%s197 + $0x6c] sm:$0xf] %v252
                %v254 = vld [vmem:[%s196 + $0xc4] sm:$0xf]
                %255 = vst [vmem:[%s197 + $0x70] sm:$0xf] %v254
                %v256 = vld [vmem:[%s196 + $0xc8] sm:$0xf]
                %257 = vst [vmem:[%s197 + $0x74] sm:$0xf] %v256
                %v258 = vld [vmem:[%s196 + $0xcc] sm:$0xf]
                %259 = vst [vmem:[%s197 + $0x78] sm:$0xf] %v258
                %v260 = vld [vmem:[%s196 + $0xd0] sm:$0xf]
                %261 = vst [vmem:[%s197 + $0x7c] sm:$0xf] %v260
                %v262 = vld [vmem:[%s196 + $0xd4] sm:$0xf]
                %263 = vst [vmem:[%s197 + $0x80] sm:$0xf] %v262
                %v264 = vld [vmem:[%s196 + $0xd8] sm:$0xf]
                %265 = vst [vmem:[%s197 + $0x84] sm:$0xf] %v264
                %v266 = vld [vmem:[%s196 + $0xdc] sm:$0xf]
                %267 = vst [vmem:[%s197 + $0x88] sm:$0xf] %v266
                %v268 = vld [vmem:[%s196 + $0xe0] sm:$0xf]
                %269 = vst [vmem:[%s197 + $0x8c] sm:$0xf] %v268
                %v270 = vld [vmem:[%s196 + $0xe4] sm:$0xf]
                %271 = vst [vmem:[%s197 + $0x90] sm:$0xf] %v270
                %v272 = vld [vmem:[%s196 + $0xe8] sm:$0xf]
                %273 = vst [vmem:[%s197 + $0x94] sm:$0xf] %v272
                %v274 = vld [vmem:[%s196 + $0xec] sm:$0xf]
                %275 = vst [vmem:[%s197 + $0x98] sm:$0xf] %v274
                %v276 = vld [vmem:[%s196 + $0xf0] sm:$0xf]
                %277 = vst [vmem:[%s197 + $0x9c] sm:$0xf] %v276
                %v278 = vld [vmem:[%s196 + $0xf4] sm:$0xf]
                %279 = vst [vmem:[%s197 + $0xa0] sm:$0xf] %v278
                %v280 = vld [vmem:[%s196 + $0xf8] sm:$0xf]
                %281 = vst [vmem:[%s197 + $0xa4] sm:$0xf] %v280
                %v282 = vld [vmem:[%s196 + $0x150] sm:$0xf]
                %283 = vst [vmem:[%s197 + $0xa8] sm:$0xf] %v282
                %v284 = vld [vmem:[%s196 + $0x154] sm:$0xf]
                %285 = vst [vmem:[%s197 + $0xac] sm:$0xf] %v284
                %v286 = vld [vmem:[%s196 + $0x158] sm:$0xf]
                %287 = vst [vmem:[%s197 + $0xb0] sm:$0xf] %v286
                %v288 = vld [vmem:[%s196 + $0x15c] sm:$0xf]
                %289 = vst [vmem:[%s197 + $0xb4] sm:$0xf] %v288
                %v290 = vld [vmem:[%s196 + $0x160] sm:$0xf]
                %291 = vst [vmem:[%s197 + $0xb8] sm:$0xf] %v290
                %v292 = vld [vmem:[%s196 + $0x164] sm:$0xf]
                %293 = vst [vmem:[%s197 + $0xbc] sm:$0xf] %v292
                %v294 = vld [vmem:[%s196 + $0x168] sm:$0xf]
                %295 = vst [vmem:[%s197 + $0xc0] sm:$0xf] %v294
                %v296 = vld [vmem:[%s196 + $0x16c] sm:$0xf]
                %297 = vst [vmem:[%s197 + $0xc4] sm:$0xf] %v296
                %v298 = vld [vmem:[%s196 + $0x170] sm:$0xf]
                %299 = vst [vmem:[%s197 + $0xc8] sm:$0xf] %v298
                %v300 = vld [vmem:[%s196 + $0x174] sm:$0xf]
                %301 = vst [vmem:[%s197 + $0xcc] sm:$0xf] %v300
                %v302 = vld [vmem:[%s196 + $0x178] sm:$0xf]
                %303 = vst [vmem:[%s197 + $0xd0] sm:$0xf] %v302
                %v304 = vld [vmem:[%s196 + $0x17c] sm:$0xf]
                %305 = vst [vmem:[%s197 + $0xd4] sm:$0xf] %v304
                %v306 = vld [vmem:[%s196 + $0x180] sm:$0xf]
                %307 = vst [vmem:[%s197 + $0xd8] sm:$0xf] %v306
                %v308 = vld [vmem:[%s196 + $0x184] sm:$0xf]
                %309 = vst [vmem:[%s197 + $0xdc] sm:$0xf] %v308
                %v310 = vld [vmem:[%s196 + $0x188] sm:$0xf]
                %311 = vst [vmem:[%s197 + $0xe0] sm:$0xf] %v310
                %v312 = vld [vmem:[%s196 + $0x18c] sm:$0xf]
                %313 = vst [vmem:[%s197 + $0xe4] sm:$0xf] %v312
                %v314 = vld [vmem:[%s196 + $0x190] sm:$0xf]
                %315 = vst [vmem:[%s197 + $0xe8] sm:$0xf] %v314
                %v316 = vld [vmem:[%s196 + $0x194] sm:$0xf]
                %317 = vst [vmem:[%s197 + $0xec] sm:$0xf] %v316
                %v318 = vld [vmem:[%s196 + $0x198] sm:$0xf]
                %319 = vst [vmem:[%s197 + $0xf0] sm:$0xf] %v318
                %v320 = vld [vmem:[%s196 + $0x19c] sm:$0xf]
                %321 = vst [vmem:[%s197 + $0xf4] sm:$0xf] %v320
                %v322 = vld [vmem:[%s196 + $0x1a0] sm:$0xf]
                %323 = vst [vmem:[%s197 + $0xf8] sm:$0xf] %v322
                %v324 = vld [vmem:[%s196 + $0x1f8] sm:$0xf]
                %325 = vst [vmem:[%s197 + $0xfc] sm:$0xf] %v324
                %v326 = vld [vmem:[%s196 + $0x1fc] sm:$0xf]
                %327 = vst [vmem:[%s197 + $0x100] sm:$0xf] %v326
                %v328 = vld [vmem:[%s196 + $0x200] sm:$0xf]
                %329 = vst [vmem:[%s197 + $0x104] sm:$0xf] %v328
                %v330 = vld [vmem:[%s196 + $0x204] sm:$0xf]
                %331 = vst [vmem:[%s197 + $0x108] sm:$0xf] %v330
                %v332 = vld [vmem:[%s196 + $0x208] sm:$0xf]
                %333 = vst [vmem:[%s197 + $0x10c] sm:$0xf] %v332
                %v334 = vld [vmem:[%s196 + $0x20c] sm:$0xf]
                %335 = vst [vmem:[%s197 + $0x110] sm:$0xf] %v334
                %v336 = vld [vmem:[%s196 + $0x210] sm:$0xf]
                %337 = vst [vmem:[%s197 + $0x114] sm:$0xf] %v336
                %v338 = vld [vmem:[%s196 + $0x214] sm:$0xf]
                %339 = vst [vmem:[%s197 + $0x118] sm:$0xf] %v338
                %v340 = vld [vmem:[%s196 + $0x218] sm:$0xf]
                %341 = vst [vmem:[%s197 + $0x11c] sm:$0xf] %v340
                %v342 = vld [vmem:[%s196 + $0x21c] sm:$0xf]
                %343 = vst [vmem:[%s197 + $0x120] sm:$0xf] %v342
                %v344 = vld [vmem:[%s196 + $0x220] sm:$0xf]
                %345 = vst [vmem:[%s197 + $0x124] sm:$0xf] %v344
                %v346 = vld [vmem:[%s196 + $0x224] sm:$0xf]
                %347 = vst [vmem:[%s197 + $0x128] sm:$0xf] %v346
                %v348 = vld [vmem:[%s196 + $0x228] sm:$0xf]
                %349 = vst [vmem:[%s197 + $0x12c] sm:$0xf] %v348
                %v350 = vld [vmem:[%s196 + $0x22c] sm:$0xf]
                %351 = vst [vmem:[%s197 + $0x130] sm:$0xf] %v350
                %v352 = vld [vmem:[%s196 + $0x230] sm:$0xf]
                %353 = vst [vmem:[%s197 + $0x134] sm:$0xf] %v352
                %v354 = vld [vmem:[%s196 + $0x234] sm:$0xf]
                %355 = vst [vmem:[%s197 + $0x138] sm:$0xf] %v354
                %v356 = vld [vmem:[%s196 + $0x238] sm:$0xf]
                %357 = vst [vmem:[%s197 + $0x13c] sm:$0xf] %v356
                %v358 = vld [vmem:[%s196 + $0x23c] sm:$0xf]
                %359 = vst [vmem:[%s197 + $0x140] sm:$0xf] %v358
                %v360 = vld [vmem:[%s196 + $0x240] sm:$0xf]
                %361 = vst [vmem:[%s197 + $0x144] sm:$0xf] %v360
                %v362 = vld [vmem:[%s196 + $0x244] sm:$0xf]
                %363 = vst [vmem:[%s197 + $0x148] sm:$0xf] %v362
                %v364 = vld [vmem:[%s196 + $0x248] sm:$0xf]
                %365 = vst [vmem:[%s197 + $0x14c] sm:$0xf] %v364
                %v366 = vld [vmem:[%s196 + $0x2a0] sm:$0xf]
                %367 = vst [vmem:[%s197 + $0x150] sm:$0xf] %v366
                %v368 = vld [vmem:[%s196 + $0x2a4] sm:$0xf]
                %369 = vst [vmem:[%s197 + $0x154] sm:$0xf] %v368
                %v370 = vld [vmem:[%s196 + $0x2a8] sm:$0xf]
                %371 = vst [vmem:[%s197 + $0x158] sm:$0xf] %v370
                %v372 = vld [vmem:[%s196 + $0x2ac] sm:$0xf]
                %373 = vst [vmem:[%s197 + $0x15c] sm:$0xf] %v372
                %v374 = vld [vmem:[%s196 + $0x2b0] sm:$0xf]
                %375 = vst [vmem:[%s197 + $0x160] sm:$0xf] %v374
                %v376 = vld [vmem:[%s196 + $0x2b4] sm:$0xf]
                %377 = vst [vmem:[%s197 + $0x164] sm:$0xf] %v376
                %v378 = vld [vmem:[%s196 + $0x2b8] sm:$0xf]
                %379 = vst [vmem:[%s197 + $0x168] sm:$0xf] %v378
                %v380 = vld [vmem:[%s196 + $0x2bc] sm:$0xf]
                %381 = vst [vmem:[%s197 + $0x16c] sm:$0xf] %v380
                %v382 = vld [vmem:[%s196 + $0x2c0] sm:$0xf]
                %383 = vst [vmem:[%s197 + $0x170] sm:$0xf] %v382
                %v384 = vld [vmem:[%s196 + $0x2c4] sm:$0xf]
                %385 = vst [vmem:[%s197 + $0x174] sm:$0xf] %v384
                %v386 = vld [vmem:[%s196 + $0x2c8] sm:$0xf]
                %387 = vst [vmem:[%s197 + $0x178] sm:$0xf] %v386
                %v388 = vld [vmem:[%s196 + $0x2cc] sm:$0xf]
                %389 = vst [vmem:[%s197 + $0x17c] sm:$0xf] %v388
                %v390 = vld [vmem:[%s196 + $0x2d0] sm:$0xf]
                %391 = vst [vmem:[%s197 + $0x180] sm:$0xf] %v390
                %v392 = vld [vmem:[%s196 + $0x2d4] sm:$0xf]
                %393 = vst [vmem:[%s197 + $0x184] sm:$0xf] %v392
                %v394 = vld [vmem:[%s196 + $0x2d8] sm:$0xf]
                %395 = vst [vmem:[%s197 + $0x188] sm:$0xf] %v394
                %v396 = vld [vmem:[%s196 + $0x2dc] sm:$0xf]
                %397 = vst [vmem:[%s197 + $0x18c] sm:$0xf] %v396
                %v398 = vld [vmem:[%s196 + $0x2e0] sm:$0xf]
                %399 = vst [vmem:[%s197 + $0x190] sm:$0xf] %v398
                %v400 = vld [vmem:[%s196 + $0x2e4] sm:$0xf]
                %401 = vst [vmem:[%s197 + $0x194] sm:$0xf] %v400
                %v402 = vld [vmem:[%s196 + $0x2e8] sm:$0xf]
                %403 = vst [vmem:[%s197 + $0x198] sm:$0xf] %v402
                %v404 = vld [vmem:[%s196 + $0x2ec] sm:$0xf]
                %405 = vst [vmem:[%s197 + $0x19c] sm:$0xf] %v404
                %v406 = vld [vmem:[%s196 + $0x2f0] sm:$0xf]
                %407 = vst [vmem:[%s197 + $0x1a0] sm:$0xf] %v406
                %v408 = vld [vmem:[%s196 + $0x348] sm:$0xf]
                %409 = vst [vmem:[%s197 + $0x1a4] sm:$0xf] %v408
                %v410 = vld [vmem:[%s196 + $0x34c] sm:$0xf]
                %411 = vst [vmem:[%s197 + $0x1a8] sm:$0xf] %v410
                %v412 = vld [vmem:[%s196 + $0x350] sm:$0xf]
                %413 = vst [vmem:[%s197 + $0x1ac] sm:$0xf] %v412
                %v414 = vld [vmem:[%s196 + $0x354] sm:$0xf]
                %415 = vst [vmem:[%s197 + $0x1b0] sm:$0xf] %v414
                %v416 = vld [vmem:[%s196 + $0x358] sm:$0xf]
                %417 = vst [vmem:[%s197 + $0x1b4] sm:$0xf] %v416
                %v418 = vld [vmem:[%s196 + $0x35c] sm:$0xf]
                %419 = vst [vmem:[%s197 + $0x1b8] sm:$0xf] %v418
                %v420 = vld [vmem:[%s196 + $0x360] sm:$0xf]
                %421 = vst [vmem:[%s197 + $0x1bc] sm:$0xf] %v420
                %v422 = vld [vmem:[%s196 + $0x364] sm:$0xf]
                %423 = vst [vmem:[%s197 + $0x1c0] sm:$0xf] %v422
                %v424 = vld [vmem:[%s196 + $0x368] sm:$0xf]
                %425 = vst [vmem:[%s197 + $0x1c4] sm:$0xf] %v424
                %v426 = vld [vmem:[%s196 + $0x36c] sm:$0xf]
                %427 = vst [vmem:[%s197 + $0x1c8] sm:$0xf] %v426
                %v428 = vld [vmem:[%s196 + $0x370] sm:$0xf]
                %429 = vst [vmem:[%s197 + $0x1cc] sm:$0xf] %v428
                %v430 = vld [vmem:[%s196 + $0x374] sm:$0xf]
                %431 = vst [vmem:[%s197 + $0x1d0] sm:$0xf] %v430
                %v432 = vld [vmem:[%s196 + $0x378] sm:$0xf]
                %433 = vst [vmem:[%s197 + $0x1d4] sm:$0xf] %v432
                %v434 = vld [vmem:[%s196 + $0x37c] sm:$0xf]
                %435 = vst [vmem:[%s197 + $0x1d8] sm:$0xf] %v434
                %v436 = vld [vmem:[%s196 + $0x380] sm:$0xf]
                %437 = vst [vmem:[%s197 + $0x1dc] sm:$0xf] %v436
                %v438 = vld [vmem:[%s196 + $0x384] sm:$0xf]
                %439 = vst [vmem:[%s197 + $0x1e0] sm:$0xf] %v438
                %v440 = vld [vmem:[%s196 + $0x388] sm:$0xf]
                %441 = vst [vmem:[%s197 + $0x1e4] sm:$0xf] %v440
                %v442 = vld [vmem:[%s196 + $0x38c] sm:$0xf]
                %443 = vst [vmem:[%s197 + $0x1e8] sm:$0xf] %v442
                %v444 = vld [vmem:[%s196 + $0x390] sm:$0xf]
                %445 = vst [vmem:[%s197 + $0x1ec] sm:$0xf] %v444
                %v446 = vld [vmem:[%s196 + $0x394] sm:$0xf]
                %447 = vst [vmem:[%s197 + $0x1f0] sm:$0xf] %v446
                %v448 = vld [vmem:[%s196 + $0x398] sm:$0xf]
                %449 = vst [vmem:[%s197 + $0x1f4] sm:$0xf] %v448
                %v450 = vld [vmem:[%s196 + $0x3f0] sm:$0xf]
                %451 = vst [vmem:[%s197 + $0x1f8] sm:$0xf] %v450
                %v452 = vld [vmem:[%s196 + $0x3f4] sm:$0xf]
                %453 = vst [vmem:[%s197 + $0x1fc] sm:$0xf] %v452
                %v454 = vld [vmem:[%s196 + $0x3f8] sm:$0xf]
                %455 = vst [vmem:[%s197 + $0x200] sm:$0xf] %v454
                %v456 = vld [vmem:[%s196 + $0x3fc] sm:$0xf]
                %457 = vst [vmem:[%s197 + $0x204] sm:$0xf] %v456
                %v458 = vld [vmem:[%s196 + $0x400] sm:$0xf]
                %459 = vst [vmem:[%s197 + $0x208] sm:$0xf] %v458
                %v460 = vld [vmem:[%s196 + $0x404] sm:$0xf]
                %461 = vst [vmem:[%s197 + $0x20c] sm:$0xf] %v460
                %v462 = vld [vmem:[%s196 + $0x408] sm:$0xf]
                %463 = vst [vmem:[%s197 + $0x210] sm:$0xf] %v462
                %v464 = vld [vmem:[%s196 + $0x40c] sm:$0xf]
                %465 = vst [vmem:[%s197 + $0x214] sm:$0xf] %v464
                %v466 = vld [vmem:[%s196 + $0x410] sm:$0xf]
                %467 = vst [vmem:[%s197 + $0x218] sm:$0xf] %v466
                %v468 = vld [vmem:[%s196 + $0x414] sm:$0xf]
                %469 = vst [vmem:[%s197 + $0x21c] sm:$0xf] %v468
                %v470 = vld [vmem:[%s196 + $0x418] sm:$0xf]
                %471 = vst [vmem:[%s197 + $0x220] sm:$0xf] %v470
                %v472 = vld [vmem:[%s196 + $0x41c] sm:$0xf]
                %473 = vst [vmem:[%s197 + $0x224] sm:$0xf] %v472
                %v474 = vld [vmem:[%s196 + $0x420] sm:$0xf]
                %475 = vst [vmem:[%s197 + $0x228] sm:$0xf] %v474
                %v476 = vld [vmem:[%s196 + $0x424] sm:$0xf]
                %477 = vst [vmem:[%s197 + $0x22c] sm:$0xf] %v476
                %v478 = vld [vmem:[%s196 + $0x428] sm:$0xf]
                %479 = vst [vmem:[%s197 + $0x230] sm:$0xf] %v478
                %v480 = vld [vmem:[%s196 + $0x42c] sm:$0xf]
                %481 = vst [vmem:[%s197 + $0x234] sm:$0xf] %v480
                %v482 = vld [vmem:[%s196 + $0x430] sm:$0xf]
                %483 = vst [vmem:[%s197 + $0x238] sm:$0xf] %v482
                %v484 = vld [vmem:[%s196 + $0x434] sm:$0xf]
                %485 = vst [vmem:[%s197 + $0x23c] sm:$0xf] %v484
                %v486 = vld [vmem:[%s196 + $0x438] sm:$0xf]
                %487 = vst [vmem:[%s197 + $0x240] sm:$0xf] %v486
                %v488 = vld [vmem:[%s196 + $0x43c] sm:$0xf]
                %489 = vst [vmem:[%s197 + $0x244] sm:$0xf] %v488
                %v490 = vld [vmem:[%s196 + $0x440] sm:$0xf]
                %491 = vst [vmem:[%s197 + $0x248] sm:$0xf] %v490
                %v492 = vld [vmem:[%s196 + $0x498] sm:$0xf]
                %493 = vst [vmem:[%s197 + $0x24c] sm:$0xf] %v492
                %v494 = vld [vmem:[%s196 + $0x49c] sm:$0xf]
                %495 = vst [vmem:[%s197 + $0x250] sm:$0xf] %v494
                %v496 = vld [vmem:[%s196 + $0x4a0] sm:$0xf]
                %497 = vst [vmem:[%s197 + $0x254] sm:$0xf] %v496
                %v498 = vld [vmem:[%s196 + $0x4a4] sm:$0xf]
                %499 = vst [vmem:[%s197 + $0x258] sm:$0xf] %v498
                %v500 = vld [vmem:[%s196 + $0x4a8] sm:$0xf]
                %501 = vst [vmem:[%s197 + $0x25c] sm:$0xf] %v500
                %v502 = vld [vmem:[%s196 + $0x4ac] sm:$0xf]
                %503 = vst [vmem:[%s197 + $0x260] sm:$0xf] %v502
                %v504 = vld [vmem:[%s196 + $0x4b0] sm:$0xf]
                %505 = vst [vmem:[%s197 + $0x264] sm:$0xf] %v504
                %v506 = vld [vmem:[%s196 + $0x4b4] sm:$0xf]
                %507 = vst [vmem:[%s197 + $0x268] sm:$0xf] %v506
                %v508 = vld [vmem:[%s196 + $0x4b8] sm:$0xf]
                %509 = vst [vmem:[%s197 + $0x26c] sm:$0xf] %v508
                %v510 = vld [vmem:[%s196 + $0x4bc] sm:$0xf]
                %511 = vst [vmem:[%s197 + $0x270] sm:$0xf] %v510
                %v512 = vld [vmem:[%s196 + $0x4c0] sm:$0xf]
                %513 = vst [vmem:[%s197 + $0x274] sm:$0xf] %v512
                %v514 = vld [vmem:[%s196 + $0x4c4] sm:$0xf]
                %515 = vst [vmem:[%s197 + $0x278] sm:$0xf] %v514
                %v516 = vld [vmem:[%s196 + $0x4c8] sm:$0xf]
                %517 = vst [vmem:[%s197 + $0x27c] sm:$0xf] %v516
                %v518 = vld [vmem:[%s196 + $0x4cc] sm:$0xf]
                %519 = vst [vmem:[%s197 + $0x280] sm:$0xf] %v518
                %v520 = vld [vmem:[%s196 + $0x4d0] sm:$0xf]
                %521 = vst [vmem:[%s197 + $0x284] sm:$0xf] %v520
                %v522 = vld [vmem:[%s196 + $0x4d4] sm:$0xf]
                %523 = vst [vmem:[%s197 + $0x288] sm:$0xf] %v522
                %v524 = vld [vmem:[%s196 + $0x4d8] sm:$0xf]
                %525 = vst [vmem:[%s197 + $0x28c] sm:$0xf] %v524
                %v526 = vld [vmem:[%s196 + $0x4dc] sm:$0xf]
                %527 = vst [vmem:[%s197 + $0x290] sm:$0xf] %v526
                %v528 = vld [vmem:[%s196 + $0x4e0] sm:$0xf]
                %529 = vst [vmem:[%s197 + $0x294] sm:$0xf] %v528
                %v530 = vld [vmem:[%s196 + $0x4e4] sm:$0xf]
                %531 = vst [vmem:[%s197 + $0x298] sm:$0xf] %v530
                %v532 = vld [vmem:[%s196 + $0x4e8] sm:$0xf]
                %533 = vst [vmem:[%s197 + $0x29c] sm:$0xf] %v532
              $region45: #{conv2d_fft_pallas.1} parent=39 // loop_footer
                %s195 = sadd.s32 1, %s191
              $region46: #{conv2d_fft_pallas.1} parent=39 // loop_footer_branch
                %190 = sbr.rel target = $region42
              $region47: #{conv2d_fft_pallas.1} parent=39 // loop_exit
                _
            $region40: #{conv2d_fft_pallas.1} parent=31 // pred_fallthru
              _
          $region32: #{conv2d_fft_pallas.1} parent=27 // pred_fallthru
            _
          %889 = vnop
        $region28: #{conv2d_fft_pallas.1} parent=23 // pred_fallthru
          _
      $region24: #{conv2d_fft_pallas.1} parent=5 // pred_fallthru
        _
      %p890 = scmp.le.s32.totalorder 1, %s9
      %p891 = scmp.lt.s32.totalorder %s9, 3
      %p892 = pnand %p890, %p891
      %p893 = pneg %p892
      // Predicated region
      $region66: #{conv2d_fft_pallas.1} parent=5 // pred_check
        _
      $region67: #{conv2d_fft_pallas.1} parent=5 // pred_check_branch
        %895 = sbr.rel (%p892) target = $region69
      $region68: #{conv2d_fft_pallas.1} parent=5 // pred_region
        %s896 = ssub.s32 %s9, 1
        %s897 = sand.u32 %s43, 1
        %s898 = sand.u32 %s43, 1
        %s899 = smul.addr %s898, 672
        %s900 = scalar_lea.vmem [#allocation3], %s899
        // Predicated region
        $region70: #{conv2d_fft_pallas.1} parent=68 // pred_check
          %p901 = pneg %p56
        $region71: #{conv2d_fft_pallas.1} parent=68 // pred_check_branch
          %903 = sbr.rel (%p901) target = $region73
        $region72: #{conv2d_fft_pallas.1} parent=68 // pred_region
          _
        $region73: #{conv2d_fft_pallas.1} parent=68 // pred_fallthru
          _
        %s904 = sand.u32 %s43, 1
        %s905 = sand.u32 %s43, 1
        %s906 = smul.addr %s905, 672
        %s907 = scalar_lea.vmem [#allocation3], %s906
        %p908 = pneg %p56
        %p909 = pneg %p53
        %p910 = scmp.lt.s32.totalorder %s20, 0
        %s911 = scalar_select %p910, %s20, 0
        %s912 = smul.addr %s911, 4
        %s913 = scalar_lea.vmem %s1, %s912
        %p914 = pneg %p82
        %p915 = pneg %p79
        %p916 = scmp.lt.s32.totalorder %s20, 0
        %s917 = scalar_select %p916, %s20, 0
        %s918 = scalar_lea.vmem %s2, %s917
        %p919 = pneg %p108
        %p920 = pneg %p105
        %p921 = pneg %p138
        %p922 = pneg %p135
        %s923 = smul.u32 14, %s21
        %p924 = scmp.lt.s32.totalorder %s19, 1
        %s925 = scalar_select %p924, %s19, 1
        %p926 = scmp.lt.s32.totalorder %s923, 13
        %s927 = scalar_select %p926, %s923, 13
        %p928 = scmp.lt.s32.totalorder %s20, 0
        %s929 = scalar_select %p928, %s20, 0
        %s930 = sadd.s32 %s929, %s927
        %s931 = smul.addr %s925, 14
        %s932 = sadd.s32 %s930, %s931
        %s933 = smul.addr %s932, 8
        %s934 = scalar_lea.vmem %s3, %s933
        %s935 = smul.u32 7, %s21
        %p936 = scmp.lt.s32.totalorder %s20, 0
        %s937 = scalar_select %p936, %s20, 0
        %s938 = smul.addr %s937, 4
        %s939 = scalar_lea.vmem %s1, %s938
        %p940 = scmp.lt.s32.totalorder %s20, 0
        %s941 = scalar_select %p940, %s20, 0
        %s942 = scalar_lea.vmem %s2, %s941
        %s943 = smul.u32 14, %s21
        %p944 = scmp.lt.s32.totalorder %s19, 1
        %s945 = scalar_select %p944, %s19, 1
        %p946 = scmp.lt.s32.totalorder %s943, 13
        %s947 = scalar_select %p946, %s943, 13
        %p948 = scmp.lt.s32.totalorder %s20, 0
        %s949 = scalar_select %p948, %s20, 0
        %s950 = sadd.s32 %s949, %s947
        %s951 = smul.addr %s945, 14
        %s952 = sadd.s32 %s950, %s951
        %s953 = smul.addr %s952, 8
        %s954 = scalar_lea.vmem %s3, %s953
        %s955 = smul.u32 14, %s21
        %v957 = vld [vmem:[%s900] sm:$0xf]
        %v958 = vld [vmem:[%s900 + $0x4] sm:$0xf]
        %v959 = vld [vmem:[%s900 + $0xc] sm:$0xf]
        %v960 = vld [vmem:[%s900 + $0x10] sm:$0xf]
        %v961 = vld [vmem:[%s900 + $0x18] sm:$0xf]
        %v962 = vld [vmem:[%s900 + $0x1c] sm:$0xf]
        %v963 = vld [vmem:[%s900 + $0x24] sm:$0xf]
        %v964 = vld [vmem:[%s900 + $0x28] sm:$0xf]
        %v965 = vld [vmem:[%s900 + $0x30] sm:$0xf]
        %v966 = vld [vmem:[%s900 + $0x34] sm:$0xf]
        %v967 = vld [vmem:[%s900 + $0x3c] sm:$0xf]
        %v968 = vld [vmem:[%s900 + $0x40] sm:$0xf]
        %v969 = vld [vmem:[%s900 + $0x48] sm:$0xf]
        %v970 = vld [vmem:[%s900 + $0x4c] sm:$0xf]
        %v985 = vunpack.c.l.b16 %v957
        %v986 = vunpack.c.l.b16 %v958
        %v987 = vunpack.c.l.b16 %v959
        %v988 = vunpack.c.l.b16 %v960
        %v989 = vunpack.c.l.b16 %v961
        %v990 = vunpack.c.l.b16 %v962
        %v991 = vunpack.c.l.b16 %v963
        %v992 = vunpack.c.l.b16 %v964
        %v993 = vunpack.c.l.b16 %v965
        %v994 = vunpack.c.l.b16 %v966
        %v995 = vunpack.c.l.b16 %v967
        %v996 = vunpack.c.l.b16 %v968
        %v997 = vunpack.c.l.b16 %v969
        %v998 = vunpack.c.l.b16 %v970
        %v999 = vpack.c.b16 %v986, %v985
        %v1000 = vpack.c.b16 %v988, %v987
        %v1001 = vpack.c.b16 %v990, %v989
        %v1002 = vpack.c.b16 %v992, %v991
        %v1003 = vpack.c.b16 %v994, %v993
        %v1004 = vpack.c.b16 %v996, %v995
        %v1005 = vpack.c.b16 %v998, %v997
        %vm1013 = vcmask 31744
        %1014 = vst.msk [vmem:[#allocation2] sm:$0xff] %vm1013, %v999
        %1015 = vst.msk [vmem:[#allocation2 + $0x8] sm:$0xff] %vm1013, %v1000
        %1016 = vst.msk [vmem:[#allocation2 + $0x10] sm:$0xff] %vm1013, %v1001
        %1017 = vst.msk [vmem:[#allocation2 + $0x18] sm:$0xff] %vm1013, %v1002
        %1018 = vst.msk [vmem:[#allocation2 + $0x20] sm:$0xff] %vm1013, %v1003
        %1019 = vst.msk [vmem:[#allocation2 + $0x28] sm:$0xff] %vm1013, %v1004
        %1020 = vst.msk [vmem:[#allocation2 + $0x30] sm:$0xff] %vm1013, %v1005
        %s1021 = scalar_lea.vmem %s900, 84 [#allocation3]
        %v1022 = vld [vmem:[%s1021] sm:$0xf]
        %v1023 = vld [vmem:[%s1021 + $0x4] sm:$0xf]
        %v1024 = vld [vmem:[%s1021 + $0xc] sm:$0xf]
        %v1025 = vld [vmem:[%s1021 + $0x10] sm:$0xf]
        %v1026 = vld [vmem:[%s1021 + $0x18] sm:$0xf]
        %v1027 = vld [vmem:[%s1021 + $0x1c] sm:$0xf]
        %v1028 = vld [vmem:[%s1021 + $0x24] sm:$0xf]
        %v1029 = vld [vmem:[%s1021 + $0x28] sm:$0xf]
        %v1030 = vld [vmem:[%s1021 + $0x30] sm:$0xf]
        %v1031 = vld [vmem:[%s1021 + $0x34] sm:$0xf]
        %v1032 = vld [vmem:[%s1021 + $0x3c] sm:$0xf]
        %v1033 = vld [vmem:[%s1021 + $0x40] sm:$0xf]
        %v1034 = vld [vmem:[%s1021 + $0x48] sm:$0xf]
        %v1035 = vld [vmem:[%s1021 + $0x4c] sm:$0xf]
        %v1050 = vunpack.c.l.b16 %v1022
        %v1051 = vunpack.c.l.b16 %v1023
        %v1052 = vunpack.c.l.b16 %v1024
        %v1053 = vunpack.c.l.b16 %v1025
        %v1054 = vunpack.c.l.b16 %v1026
        %v1055 = vunpack.c.l.b16 %v1027
        %v1056 = vunpack.c.l.b16 %v1028
        %v1057 = vunpack.c.l.b16 %v1029
        %v1058 = vunpack.c.l.b16 %v1030
        %v1059 = vunpack.c.l.b16 %v1031
        %v1060 = vunpack.c.l.b16 %v1032
        %v1061 = vunpack.c.l.b16 %v1033
        %v1062 = vunpack.c.l.b16 %v1034
        %v1063 = vunpack.c.l.b16 %v1035
        %v1064 = vpack.c.b16 %v1051, %v1050
        %v1065 = vpack.c.b16 %v1053, %v1052
        %v1066 = vpack.c.b16 %v1055, %v1054
        %v1067 = vpack.c.b16 %v1057, %v1056
        %v1068 = vpack.c.b16 %v1059, %v1058
        %v1069 = vpack.c.b16 %v1061, %v1060
        %v1070 = vpack.c.b16 %v1063, %v1062
        %1071 = vrot.lane.b32.xlu0 %v1064, 4
        %v1072 = vpop.permute.xlu0 %1071
        %1073 = vrot.lane.b32.xlu0 %v1065, 4
        %v1074 = vpop.permute.xlu0 %1073
        %1075 = vrot.lane.b32.xlu0 %v1066, 4
        %v1076 = vpop.permute.xlu0 %1075
        %1077 = vrot.lane.b32.xlu0 %v1067, 4
        %v1078 = vpop.permute.xlu0 %1077
        %1079 = vrot.lane.b32.xlu0 %v1068, 4
        %v1080 = vpop.permute.xlu0 %1079
        %1081 = vrot.lane.b32.xlu0 %v1069, 4
        %v1082 = vpop.permute.xlu0 %1081
        %1083 = vrot.lane.b32.xlu0 %v1070, 4
        %v1084 = vpop.permute.xlu0 %1083
        %vm1092 = vcmask 64544
        %1093 = vst.msk [vmem:[#allocation2] sm:$0xff] %vm1092, %v1072
        %1094 = vst.msk [vmem:[#allocation2 + $0x8] sm:$0xff] %vm1092, %v1074
        %1095 = vst.msk [vmem:[#allocation2 + $0x10] sm:$0xff] %vm1092, %v1076
        %1096 = vst.msk [vmem:[#allocation2 + $0x18] sm:$0xff] %vm1092, %v1078
        %1097 = vst.msk [vmem:[#allocation2 + $0x20] sm:$0xff] %vm1092, %v1080
        %1098 = vst.msk [vmem:[#allocation2 + $0x28] sm:$0xff] %vm1092, %v1082
        %1099 = vst.msk [vmem:[#allocation2 + $0x30] sm:$0xff] %vm1092, %v1084
        %v1100 = vld [vmem:[%s900] sm:$0xf]
        %v1101 = vld [vmem:[%s900 + $0x4] sm:$0xf]
        %v1102 = vld [vmem:[%s900 + $0x8] sm:$0x1]
        %v1103 = vld [vmem:[%s900 + $0xc] sm:$0xf]
        %v1104 = vld [vmem:[%s900 + $0x10] sm:$0xf]
        %v1105 = vld [vmem:[%s900 + $0x14] sm:$0x1]
        %v1106 = vld [vmem:[%s900 + $0x18] sm:$0xf]
        %v1107 = vld [vmem:[%s900 + $0x1c] sm:$0xf]
        %v1108 = vld [vmem:[%s900 + $0x20] sm:$0x1]
        %v1109 = vld [vmem:[%s900 + $0x24] sm:$0xf]
        %v1110 = vld [vmem:[%s900 + $0x28] sm:$0xf]
        %v1111 = vld [vmem:[%s900 + $0x2c] sm:$0x1]
        %v1112 = vld [vmem:[%s900 + $0x30] sm:$0xf]
        %v1113 = vld [vmem:[%s900 + $0x34] sm:$0xf]
        %v1114 = vld [vmem:[%s900 + $0x38] sm:$0x1]
        %v1115 = vld [vmem:[%s900 + $0x3c] sm:$0xf]
        %v1116 = vld [vmem:[%s900 + $0x40] sm:$0xf]
        %v1117 = vld [vmem:[%s900 + $0x44] sm:$0x1]
        %v1118 = vld [vmem:[%s900 + $0x48] sm:$0xf]
        %v1119 = vld [vmem:[%s900 + $0x4c] sm:$0xf]
        %v1120 = vld [vmem:[%s900 + $0x50] sm:$0x1]
        %v1142 = vunpack.c.l.b16 %v1100
        %v1143 = vunpack.c.l.b16 %v1101
        %v1144 = vunpack.c.l.b16 %v1102
        %v1145 = vunpack.c.l.b16 %v1103
        %v1146 = vunpack.c.l.b16 %v1104
        %v1147 = vunpack.c.l.b16 %v1105
        %v1148 = vunpack.c.l.b16 %v1106
        %v1149 = vunpack.c.l.b16 %v1107
        %v1150 = vunpack.c.l.b16 %v1108
        %v1151 = vunpack.c.l.b16 %v1109
        %v1152 = vunpack.c.l.b16 %v1110
        %v1153 = vunpack.c.l.b16 %v1111
        %v1154 = vunpack.c.l.b16 %v1112
        %v1155 = vunpack.c.l.b16 %v1113
        %v1156 = vunpack.c.l.b16 %v1114
        %v1157 = vunpack.c.l.b16 %v1115
        %v1158 = vunpack.c.l.b16 %v1116
        %v1159 = vunpack.c.l.b16 %v1117
        %v1160 = vunpack.c.l.b16 %v1118
        %v1161 = vunpack.c.l.b16 %v1119
        %v1162 = vunpack.c.l.b16 %v1120
        %v1163 = vpack.c.b16 %v1143, %v1142
        %v1164 = vpack.c.b16 %v1144, %v1144
        %v1165 = vpack.c.b16 %v1146, %v1145
        %v1166 = vpack.c.b16 %v1147, %v1147
        %v1167 = vpack.c.b16 %v1149, %v1148
        %v1168 = vpack.c.b16 %v1150, %v1150
        %v1169 = vpack.c.b16 %v1152, %v1151
        %v1170 = vpack.c.b16 %v1153, %v1153
        %v1171 = vpack.c.b16 %v1155, %v1154
        %v1172 = vpack.c.b16 %v1156, %v1156
        %v1173 = vpack.c.b16 %v1158, %v1157
        %v1174 = vpack.c.b16 %v1159, %v1159
        %v1175 = vpack.c.b16 %v1161, %v1160
        %v1176 = vpack.c.b16 %v1162, %v1162
        %vm1177 = vsmask.f32 7424
        %v1179 = vshrl.u32 %v1163, 16
        %v1181 = vshll.u32 %v1163, 16
        %v1183 = vrot.slane %v1181, 1
        %v1184 = vor.u32 %v1179, %v1183
        %v1186 = vshll.u32 %v1164, 16
        %v1188 = vrot.slane %v1186, 1
        %v1189 = vsel %vm1177, %v1184, %v1188
        %v1191 = vshrl.u32 %v1165, 16
        %v1193 = vshll.u32 %v1165, 16
        %v1195 = vrot.slane %v1193, 1
        %v1196 = vor.u32 %v1191, %v1195
        %v1198 = vshll.u32 %v1166, 16
        %v1200 = vrot.slane %v1198, 1
        %v1201 = vsel %vm1177, %v1196, %v1200
        %v1203 = vshrl.u32 %v1167, 16
        %v1205 = vshll.u32 %v1167, 16
        %v1207 = vrot.slane %v1205, 1
        %v1208 = vor.u32 %v1203, %v1207
        %v1210 = vshll.u32 %v1168, 16
        %v1212 = vrot.slane %v1210, 1
        %v1213 = vsel %vm1177, %v1208, %v1212
        %v1215 = vshrl.u32 %v1169, 16
        %v1217 = vshll.u32 %v1169, 16
        %v1219 = vrot.slane %v1217, 1
        %v1220 = vor.u32 %v1215, %v1219
        %v1222 = vshll.u32 %v1170, 16
        %v1224 = vrot.slane %v1222, 1
        %v1225 = vsel %vm1177, %v1220, %v1224
        %v1227 = vshrl.u32 %v1171, 16
        %v1229 = vshll.u32 %v1171, 16
        %v1231 = vrot.slane %v1229, 1
        %v1232 = vor.u32 %v1227, %v1231
        %v1234 = vshll.u32 %v1172, 16
        %v1236 = vrot.slane %v1234, 1
        %v1237 = vsel %vm1177, %v1232, %v1236
        %v1239 = vshrl.u32 %v1173, 16
        %v1241 = vshll.u32 %v1173, 16
        %v1243 = vrot.slane %v1241, 1
        %v1244 = vor.u32 %v1239, %v1243
        %v1246 = vshll.u32 %v1174, 16
        %v1248 = vrot.slane %v1246, 1
        %v1249 = vsel %vm1177, %v1244, %v1248
        %v1251 = vshrl.u32 %v1175, 16
        %v1253 = vshll.u32 %v1175, 16
        %v1255 = vrot.slane %v1253, 1
        %v1256 = vor.u32 %v1251, %v1255
        %v1258 = vshll.u32 %v1176, 16
        %v1260 = vrot.slane %v1258, 1
        %v1261 = vsel %vm1177, %v1256, %v1260
        %1262 = vrot.lane.b32.xlu0 %v1189, 8
        %v1263 = vpop.permute.xlu0 %1262
        %1264 = vrot.lane.b32.xlu0 %v1201, 8
        %v1265 = vpop.permute.xlu0 %1264
        %1266 = vrot.lane.b32.xlu0 %v1213, 8
        %v1267 = vpop.permute.xlu0 %1266
        %1268 = vrot.lane.b32.xlu0 %v1225, 8
        %v1269 = vpop.permute.xlu0 %1268
        %1270 = vrot.lane.b32.xlu0 %v1237, 8
        %v1271 = vpop.permute.xlu0 %1270
        %1272 = vrot.lane.b32.xlu0 %v1249, 8
        %v1273 = vpop.permute.xlu0 %1272
        %1274 = vrot.lane.b32.xlu0 %v1261, 8
        %v1275 = vpop.permute.xlu0 %1274
        %vm1283 = vcmask 97344
        %1284 = vst.msk [vmem:[#allocation2] sm:$0xff] %vm1283, %v1263
        %1285 = vst.msk [vmem:[#allocation2 + $0x8] sm:$0xff] %vm1283, %v1265
        %1286 = vst.msk [vmem:[#allocation2 + $0x10] sm:$0xff] %vm1283, %v1267
        %1287 = vst.msk [vmem:[#allocation2 + $0x18] sm:$0xff] %vm1283, %v1269
        %1288 = vst.msk [vmem:[#allocation2 + $0x20] sm:$0xff] %vm1283, %v1271
        %1289 = vst.msk [vmem:[#allocation2 + $0x28] sm:$0xff] %vm1283, %v1273
        %1290 = vst.msk [vmem:[#allocation2 + $0x30] sm:$0xff] %vm1283, %v1275
        %s1291 = scalar_lea.vmem %s900, 168 [#allocation3]
        %v1292 = vld [vmem:[%s1291] sm:$0xf]
        %v1293 = vld [vmem:[%s1291 + $0x4] sm:$0xf]
        %v1294 = vld [vmem:[%s1291 + $0xc] sm:$0xf]
        %v1295 = vld [vmem:[%s1291 + $0x10] sm:$0xf]
        %v1296 = vld [vmem:[%s1291 + $0x18] sm:$0xf]
        %v1297 = vld [vmem:[%s1291 + $0x1c] sm:$0xf]
        %v1298 = vld [vmem:[%s1291 + $0x24] sm:$0xf]
        %v1299 = vld [vmem:[%s1291 + $0x28] sm:$0xf]
        %v1300 = vld [vmem:[%s1291 + $0x30] sm:$0xf]
        %v1301 = vld [vmem:[%s1291 + $0x34] sm:$0xf]
        %v1302 = vld [vmem:[%s1291 + $0x3c] sm:$0xf]
        %v1303 = vld [vmem:[%s1291 + $0x40] sm:$0xf]
        %v1304 = vld [vmem:[%s1291 + $0x48] sm:$0xf]
        %v1305 = vld [vmem:[%s1291 + $0x4c] sm:$0xf]
        %v1320 = vunpack.c.l.b16 %v1292
        %v1321 = vunpack.c.l.b16 %v1293
        %v1322 = vunpack.c.l.b16 %v1294
        %v1323 = vunpack.c.l.b16 %v1295
        %v1324 = vunpack.c.l.b16 %v1296
        %v1325 = vunpack.c.l.b16 %v1297
        %v1326 = vunpack.c.l.b16 %v1298
        %v1327 = vunpack.c.l.b16 %v1299
        %v1328 = vunpack.c.l.b16 %v1300
        %v1329 = vunpack.c.l.b16 %v1301
        %v1330 = vunpack.c.l.b16 %v1302
        %v1331 = vunpack.c.l.b16 %v1303
        %v1332 = vunpack.c.l.b16 %v1304
        %v1333 = vunpack.c.l.b16 %v1305
        %v1334 = vpack.c.b16 %v1321, %v1320
        %v1335 = vpack.c.b16 %v1323, %v1322
        %v1336 = vpack.c.b16 %v1325, %v1324
        %v1337 = vpack.c.b16 %v1327, %v1326
        %v1338 = vpack.c.b16 %v1329, %v1328
        %v1339 = vpack.c.b16 %v1331, %v1330
        %v1340 = vpack.c.b16 %v1333, %v1332
        %1341 = vrot.lane.b32.xlu0 %v1334, 12
        %v1342 = vpop.permute.xlu0 %1341
        %1343 = vrot.lane.b32.xlu0 %v1335, 12
        %v1344 = vpop.permute.xlu0 %1343
        %1345 = vrot.lane.b32.xlu0 %v1336, 12
        %v1346 = vpop.permute.xlu0 %1345
        %1347 = vrot.lane.b32.xlu0 %v1337, 12
        %v1348 = vpop.permute.xlu0 %1347
        %1349 = vrot.lane.b32.xlu0 %v1338, 12
        %v1350 = vpop.permute.xlu0 %1349
        %1351 = vrot.lane.b32.xlu0 %v1339, 12
        %v1352 = vpop.permute.xlu0 %1351
        %1353 = vrot.lane.b32.xlu0 %v1340, 12
        %v1354 = vpop.permute.xlu0 %1353
        %vm1362 = vcmask 130144
        %1363 = vst.msk [vmem:[#allocation2] sm:$0xff] %vm1362, %v1342
        %1364 = vst.msk [vmem:[#allocation2 + $0x8] sm:$0xff] %vm1362, %v1344
        %1365 = vst.msk [vmem:[#allocation2 + $0x10] sm:$0xff] %vm1362, %v1346
        %1366 = vst.msk [vmem:[#allocation2 + $0x18] sm:$0xff] %vm1362, %v1348
        %1367 = vst.msk [vmem:[#allocation2 + $0x20] sm:$0xff] %vm1362, %v1350
        %1368 = vst.msk [vmem:[#allocation2 + $0x28] sm:$0xff] %vm1362, %v1352
        %1369 = vst.msk [vmem:[#allocation2 + $0x30] sm:$0xff] %vm1362, %v1354
        %s1370 = scalar_lea.vmem %s900, 252 [#allocation3]
        %v1371 = vld [vmem:[%s1370] sm:$0xf]
        %v1372 = vld [vmem:[%s1370 + $0x4] sm:$0xf]
        %v1373 = vld [vmem:[%s1370 + $0xc] sm:$0xf]
        %v1374 = vld [vmem:[%s1370 + $0x10] sm:$0xf]
        %v1375 = vld [vmem:[%s1370 + $0x18] sm:$0xf]
        %v1376 = vld [vmem:[%s1370 + $0x1c] sm:$0xf]
        %v1377 = vld [vmem:[%s1370 + $0x24] sm:$0xf]
        %v1378 = vld [vmem:[%s1370 + $0x28] sm:$0xf]
        %v1379 = vld [vmem:[%s1370 + $0x30] sm:$0xf]
        %v1380 = vld [vmem:[%s1370 + $0x34] sm:$0xf]
        %v1381 = vld [vmem:[%s1370 + $0x3c] sm:$0xf]
        %v1382 = vld [vmem:[%s1370 + $0x40] sm:$0xf]
        %v1383 = vld [vmem:[%s1370 + $0x48] sm:$0xf]
        %v1384 = vld [vmem:[%s1370 + $0x4c] sm:$0xf]
        %v1399 = vunpack.c.l.b16 %v1371
        %v1400 = vunpack.c.l.b16 %v1372
        %v1401 = vunpack.c.l.b16 %v1373
        %v1402 = vunpack.c.l.b16 %v1374
        %v1403 = vunpack.c.l.b16 %v1375
        %v1404 = vunpack.c.l.b16 %v1376
        %v1405 = vunpack.c.l.b16 %v1377
        %v1406 = vunpack.c.l.b16 %v1378
        %v1407 = vunpack.c.l.b16 %v1379
        %v1408 = vunpack.c.l.b16 %v1380
        %v1409 = vunpack.c.l.b16 %v1381
        %v1410 = vunpack.c.l.b16 %v1382
        %v1411 = vunpack.c.l.b16 %v1383
        %v1412 = vunpack.c.l.b16 %v1384
        %v1413 = vpack.c.b16 %v1400, %v1399
        %v1414 = vpack.c.b16 %v1402, %v1401
        %v1415 = vpack.c.b16 %v1404, %v1403
        %v1416 = vpack.c.b16 %v1406, %v1405
        %v1417 = vpack.c.b16 %v1408, %v1407
        %v1418 = vpack.c.b16 %v1410, %v1409
        %v1419 = vpack.c.b16 %v1412, %v1411
        %1420 = vrot.lane.b32.xlu0 %v1413, 16
        %v1421 = vpop.permute.xlu0 %1420
        %1422 = vrot.lane.b32.xlu0 %v1414, 16
        %v1423 = vpop.permute.xlu0 %1422
        %1424 = vrot.lane.b32.xlu0 %v1415, 16
        %v1425 = vpop.permute.xlu0 %1424
        %1426 = vrot.lane.b32.xlu0 %v1416, 16
        %v1427 = vpop.permute.xlu0 %1426
        %1428 = vrot.lane.b32.xlu0 %v1417, 16
        %v1429 = vpop.permute.xlu0 %1428
        %1430 = vrot.lane.b32.xlu0 %v1418, 16
        %v1431 = vpop.permute.xlu0 %1430
        %1432 = vrot.lane.b32.xlu0 %v1419, 16
        %v1433 = vpop.permute.xlu0 %1432
        %vm1441 = vcmask 162944
        %1442 = vst.msk [vmem:[#allocation2] sm:$0xff] %vm1441, %v1421
        %1443 = vst.msk [vmem:[#allocation2 + $0x8] sm:$0xff] %vm1441, %v1423
        %1444 = vst.msk [vmem:[#allocation2 + $0x10] sm:$0xff] %vm1441, %v1425
        %1445 = vst.msk [vmem:[#allocation2 + $0x18] sm:$0xff] %vm1441, %v1427
        %1446 = vst.msk [vmem:[#allocation2 + $0x20] sm:$0xff] %vm1441, %v1429
        %1447 = vst.msk [vmem:[#allocation2 + $0x28] sm:$0xff] %vm1441, %v1431
        %1448 = vst.msk [vmem:[#allocation2 + $0x30] sm:$0xff] %vm1441, %v1433
        %v1449 = vld [vmem:[%s1291] sm:$0xf]
        %v1450 = vld [vmem:[%s1291 + $0x4] sm:$0xf]
        %v1451 = vld [vmem:[%s1291 + $0x8] sm:$0x1]
        %v1452 = vld [vmem:[%s1291 + $0xc] sm:$0xf]
        %v1453 = vld [vmem:[%s1291 + $0x10] sm:$0xf]
        %v1454 = vld [vmem:[%s1291 + $0x14] sm:$0x1]
        %v1455 = vld [vmem:[%s1291 + $0x18] sm:$0xf]
        %v1456 = vld [vmem:[%s1291 + $0x1c] sm:$0xf]
        %v1457 = vld [vmem:[%s1291 + $0x20] sm:$0x1]
        %v1458 = vld [vmem:[%s1291 + $0x24] sm:$0xf]
        %v1459 = vld [vmem:[%s1291 + $0x28] sm:$0xf]
        %v1460 = vld [vmem:[%s1291 + $0x2c] sm:$0x1]
        %v1461 = vld [vmem:[%s1291 + $0x30] sm:$0xf]
        %v1462 = vld [vmem:[%s1291 + $0x34] sm:$0xf]
        %v1463 = vld [vmem:[%s1291 + $0x38] sm:$0x1]
        %v1464 = vld [vmem:[%s1291 + $0x3c] sm:$0xf]
        %v1465 = vld [vmem:[%s1291 + $0x40] sm:$0xf]
        %v1466 = vld [vmem:[%s1291 + $0x44] sm:$0x1]
        %v1467 = vld [vmem:[%s1291 + $0x48] sm:$0xf]
        %v1468 = vld [vmem:[%s1291 + $0x4c] sm:$0xf]
        %v1469 = vld [vmem:[%s1291 + $0x50] sm:$0x1]
        %v1491 = vunpack.c.l.b16 %v1449
        %v1492 = vunpack.c.l.b16 %v1450
        %v1493 = vunpack.c.l.b16 %v1451
        %v1494 = vunpack.c.l.b16 %v1452
        %v1495 = vunpack.c.l.b16 %v1453
        %v1496 = vunpack.c.l.b16 %v1454
        %v1497 = vunpack.c.l.b16 %v1455
        %v1498 = vunpack.c.l.b16 %v1456
        %v1499 = vunpack.c.l.b16 %v1457
        %v1500 = vunpack.c.l.b16 %v1458
        %v1501 = vunpack.c.l.b16 %v1459
        %v1502 = vunpack.c.l.b16 %v1460
        %v1503 = vunpack.c.l.b16 %v1461
        %v1504 = vunpack.c.l.b16 %v1462
        %v1505 = vunpack.c.l.b16 %v1463
        %v1506 = vunpack.c.l.b16 %v1464
        %v1507 = vunpack.c.l.b16 %v1465
        %v1508 = vunpack.c.l.b16 %v1466
        %v1509 = vunpack.c.l.b16 %v1467
        %v1510 = vunpack.c.l.b16 %v1468
        %v1511 = vunpack.c.l.b16 %v1469
        %v1512 = vpack.c.b16 %v1492, %v1491
        %v1513 = vpack.c.b16 %v1493, %v1493
        %v1514 = vpack.c.b16 %v1495, %v1494
        %v1515 = vpack.c.b16 %v1496, %v1496
        %v1516 = vpack.c.b16 %v1498, %v1497
        %v1517 = vpack.c.b16 %v1499, %v1499
        %v1518 = vpack.c.b16 %v1501, %v1500
        %v1519 = vpack.c.b16 %v1502, %v1502
        %v1520 = vpack.c.b16 %v1504, %v1503
        %v1521 = vpack.c.b16 %v1505, %v1505
        %v1522 = vpack.c.b16 %v1507, %v1506
        %v1523 = vpack.c.b16 %v1508, %v1508
        %v1524 = vpack.c.b16 %v1510, %v1509
        %v1525 = vpack.c.b16 %v1511, %v1511
        %v1527 = vshrl.u32 %v1512, 16
        %v1529 = vshll.u32 %v1512, 16
        %v1531 = vrot.slane %v1529, 1
        %v1532 = vor.u32 %v1527, %v1531
        %v1534 = vshll.u32 %v1513, 16
        %v1536 = vrot.slane %v1534, 1
        %v1537 = vsel %vm1177, %v1532, %v1536
        %v1539 = vshrl.u32 %v1514, 16
        %v1541 = vshll.u32 %v1514, 16
        %v1543 = vrot.slane %v1541, 1
        %v1544 = vor.u32 %v1539, %v1543
        %v1546 = vshll.u32 %v1515, 16
        %v1548 = vrot.slane %v1546, 1
        %v1549 = vsel %vm1177, %v1544, %v1548
        %v1551 = vshrl.u32 %v1516, 16
        %v1553 = vshll.u32 %v1516, 16
        %v1555 = vrot.slane %v1553, 1
        %v1556 = vor.u32 %v1551, %v1555
        %v1558 = vshll.u32 %v1517, 16
        %v1560 = vrot.slane %v1558, 1
        %v1561 = vsel %vm1177, %v1556, %v1560
        %v1563 = vshrl.u32 %v1518, 16
        %v1565 = vshll.u32 %v1518, 16
        %v1567 = vrot.slane %v1565, 1
        %v1568 = vor.u32 %v1563, %v1567
        %v1570 = vshll.u32 %v1519, 16
        %v1572 = vrot.slane %v1570, 1
        %v1573 = vsel %vm1177, %v1568, %v1572
        %v1575 = vshrl.u32 %v1520, 16
        %v1577 = vshll.u32 %v1520, 16
        %v1579 = vrot.slane %v1577, 1
        %v1580 = vor.u32 %v1575, %v1579
        %v1582 = vshll.u32 %v1521, 16
        %v1584 = vrot.slane %v1582, 1
        %v1585 = vsel %vm1177, %v1580, %v1584
        %v1587 = vshrl.u32 %v1522, 16
        %v1589 = vshll.u32 %v1522, 16
        %v1591 = vrot.slane %v1589, 1
        %v1592 = vor.u32 %v1587, %v1591
        %v1594 = vshll.u32 %v1523, 16
        %v1596 = vrot.slane %v1594, 1
        %v1597 = vsel %vm1177, %v1592, %v1596
        %v1599 = vshrl.u32 %v1524, 16
        %v1601 = vshll.u32 %v1524, 16
        %v1603 = vrot.slane %v1601, 1
        %v1604 = vor.u32 %v1599, %v1603
        %v1606 = vshll.u32 %v1525, 16
        %v1608 = vrot.slane %v1606, 1
        %v1609 = vsel %vm1177, %v1604, %v1608
        %1610 = vrot.lane.b32.xlu0 %v1537, 20
        %v1611 = vpop.permute.xlu0 %1610
        %1612 = vrot.lane.b32.xlu0 %v1549, 20
        %v1613 = vpop.permute.xlu0 %1612
        %1614 = vrot.lane.b32.xlu0 %v1561, 20
        %v1615 = vpop.permute.xlu0 %1614
        %1616 = vrot.lane.b32.xlu0 %v1573, 20
        %v1617 = vpop.permute.xlu0 %1616
        %1618 = vrot.lane.b32.xlu0 %v1585, 20
        %v1619 = vpop.permute.xlu0 %1618
        %1620 = vrot.lane.b32.xlu0 %v1597, 20
        %v1621 = vpop.permute.xlu0 %1620
        %1622 = vrot.lane.b32.xlu0 %v1609, 20
        %v1623 = vpop.permute.xlu0 %1622
        %vm1631 = vcmask 195744
        %1632 = vst.msk [vmem:[#allocation2] sm:$0xff] %vm1631, %v1611
        %1633 = vst.msk [vmem:[#allocation2 + $0x8] sm:$0xff] %vm1631, %v1613
        %1634 = vst.msk [vmem:[#allocation2 + $0x10] sm:$0xff] %vm1631, %v1615
        %1635 = vst.msk [vmem:[#allocation2 + $0x18] sm:$0xff] %vm1631, %v1617
        %1636 = vst.msk [vmem:[#allocation2 + $0x20] sm:$0xff] %vm1631, %v1619
        %1637 = vst.msk [vmem:[#allocation2 + $0x28] sm:$0xff] %vm1631, %v1621
        %1638 = vst.msk [vmem:[#allocation2 + $0x30] sm:$0xff] %vm1631, %v1623
        %s1639 = scalar_lea.vmem %s900, 336 [#allocation3]
        %v1640 = vld [vmem:[%s1639] sm:$0xf]
        %v1641 = vld [vmem:[%s1639 + $0x4] sm:$0xf]
        %v1642 = vld [vmem:[%s1639 + $0xc] sm:$0xf]
        %v1643 = vld [vmem:[%s1639 + $0x10] sm:$0xf]
        %v1644 = vld [vmem:[%s1639 + $0x18] sm:$0xf]
        %v1645 = vld [vmem:[%s1639 + $0x1c] sm:$0xf]
        %v1646 = vld [vmem:[%s1639 + $0x24] sm:$0xf]
        %v1647 = vld [vmem:[%s1639 + $0x28] sm:$0xf]
        %v1648 = vld [vmem:[%s1639 + $0x30] sm:$0xf]
        %v1649 = vld [vmem:[%s1639 + $0x34] sm:$0xf]
        %v1650 = vld [vmem:[%s1639 + $0x3c] sm:$0xf]
        %v1651 = vld [vmem:[%s1639 + $0x40] sm:$0xf]
        %v1652 = vld [vmem:[%s1639 + $0x48] sm:$0xf]
        %v1653 = vld [vmem:[%s1639 + $0x4c] sm:$0xf]
        %v1668 = vunpack.c.l.b16 %v1640
        %v1669 = vunpack.c.l.b16 %v1641
        %v1670 = vunpack.c.l.b16 %v1642
        %v1671 = vunpack.c.l.b16 %v1643
        %v1672 = vunpack.c.l.b16 %v1644
        %v1673 = vunpack.c.l.b16 %v1645
        %v1674 = vunpack.c.l.b16 %v1646
        %v1675 = vunpack.c.l.b16 %v1647
        %v1676 = vunpack.c.l.b16 %v1648
        %v1677 = vunpack.c.l.b16 %v1649
        %v1678 = vunpack.c.l.b16 %v1650
        %v1679 = vunpack.c.l.b16 %v1651
        %v1680 = vunpack.c.l.b16 %v1652
        %v1681 = vunpack.c.l.b16 %v1653
        %v1682 = vpack.c.b16 %v1669, %v1668
        %v1683 = vpack.c.b16 %v1671, %v1670
        %v1684 = vpack.c.b16 %v1673, %v1672
        %v1685 = vpack.c.b16 %v1675, %v1674
        %v1686 = vpack.c.b16 %v1677, %v1676
        %v1687 = vpack.c.b16 %v1679, %v1678
        %v1688 = vpack.c.b16 %v1681, %v1680
        %1689 = vrot.lane.b32.xlu0 %v1682, 24
        %v1690 = vpop.permute.xlu0 %1689
        %1691 = vrot.lane.b32.xlu0 %v1683, 24
        %v1692 = vpop.permute.xlu0 %1691
        %1693 = vrot.lane.b32.xlu0 %v1684, 24
        %v1694 = vpop.permute.xlu0 %1693
        %1695 = vrot.lane.b32.xlu0 %v1685, 24
        %v1696 = vpop.permute.xlu0 %1695
        %1697 = vrot.lane.b32.xlu0 %v1686, 24
        %v1698 = vpop.permute.xlu0 %1697
        %1699 = vrot.lane.b32.xlu0 %v1687, 24
        %v1700 = vpop.permute.xlu0 %1699
        %1701 = vrot.lane.b32.xlu0 %v1688, 24
        %v1702 = vpop.permute.xlu0 %1701
        %vm1710 = vcmask 228544
        %1711 = vst.msk [vmem:[#allocation2] sm:$0xff] %vm1710, %v1690
        %1712 = vst.msk [vmem:[#allocation2 + $0x8] sm:$0xff] %vm1710, %v1692
        %1713 = vst.msk [vmem:[#allocation2 + $0x10] sm:$0xff] %vm1710, %v1694
        %1714 = vst.msk [vmem:[#allocation2 + $0x18] sm:$0xff] %vm1710, %v1696
        %1715 = vst.msk [vmem:[#allocation2 + $0x20] sm:$0xff] %vm1710, %v1698
        %1716 = vst.msk [vmem:[#allocation2 + $0x28] sm:$0xff] %vm1710, %v1700
        %1717 = vst.msk [vmem:[#allocation2 + $0x30] sm:$0xff] %vm1710, %v1702
        %s1718 = scalar_lea.vmem %s900, 420 [#allocation3]
        %v1719 = vld [vmem:[%s1718] sm:$0xf]
        %v1720 = vld [vmem:[%s1718 + $0x4] sm:$0xf]
        %v1721 = vld [vmem:[%s1718 + $0xc] sm:$0xf]
        %v1722 = vld [vmem:[%s1718 + $0x10] sm:$0xf]
        %v1723 = vld [vmem:[%s1718 + $0x18] sm:$0xf]
        %v1724 = vld [vmem:[%s1718 + $0x1c] sm:$0xf]
        %v1725 = vld [vmem:[%s1718 + $0x24] sm:$0xf]
        %v1726 = vld [vmem:[%s1718 + $0x28] sm:$0xf]
        %v1727 = vld [vmem:[%s1718 + $0x30] sm:$0xf]
        %v1728 = vld [vmem:[%s1718 + $0x34] sm:$0xf]
        %v1729 = vld [vmem:[%s1718 + $0x3c] sm:$0xf]
        %v1730 = vld [vmem:[%s1718 + $0x40] sm:$0xf]
        %v1731 = vld [vmem:[%s1718 + $0x48] sm:$0xf]
        %v1732 = vld [vmem:[%s1718 + $0x4c] sm:$0xf]
        %v1747 = vunpack.c.l.b16 %v1719
        %v1748 = vunpack.c.l.b16 %v1720
        %v1749 = vunpack.c.l.b16 %v1721
        %v1750 = vunpack.c.l.b16 %v1722
        %v1751 = vunpack.c.l.b16 %v1723
        %v1752 = vunpack.c.l.b16 %v1724
        %v1753 = vunpack.c.l.b16 %v1725
        %v1754 = vunpack.c.l.b16 %v1726
        %v1755 = vunpack.c.l.b16 %v1727
        %v1756 = vunpack.c.l.b16 %v1728
        %v1757 = vunpack.c.l.b16 %v1729
        %v1758 = vunpack.c.l.b16 %v1730
        %v1759 = vunpack.c.l.b16 %v1731
        %v1760 = vunpack.c.l.b16 %v1732
        %v1761 = vpack.c.b16 %v1748, %v1747
        %v1762 = vpack.c.b16 %v1750, %v1749
        %v1763 = vpack.c.b16 %v1752, %v1751
        %v1764 = vpack.c.b16 %v1754, %v1753
        %v1765 = vpack.c.b16 %v1756, %v1755
        %v1766 = vpack.c.b16 %v1758, %v1757
        %v1767 = vpack.c.b16 %v1760, %v1759
        %1768 = vrot.lane.b32.xlu0 %v1761, 28
        %v1769 = vpop.permute.xlu0 %1768
        %1770 = vrot.lane.b32.xlu0 %v1762, 28
        %v1771 = vpop.permute.xlu0 %1770
        %1772 = vrot.lane.b32.xlu0 %v1763, 28
        %v1773 = vpop.permute.xlu0 %1772
        %1774 = vrot.lane.b32.xlu0 %v1764, 28
        %v1775 = vpop.permute.xlu0 %1774
        %1776 = vrot.lane.b32.xlu0 %v1765, 28
        %v1777 = vpop.permute.xlu0 %1776
        %1778 = vrot.lane.b32.xlu0 %v1766, 28
        %v1779 = vpop.permute.xlu0 %1778
        %1780 = vrot.lane.b32.xlu0 %v1767, 28
        %v1781 = vpop.permute.xlu0 %1780
        %vm1789 = vcmask 261344
        %1790 = vst.msk [vmem:[#allocation2] sm:$0xff] %vm1789, %v1769
        %1791 = vst.msk [vmem:[#allocation2 + $0x8] sm:$0xff] %vm1789, %v1771
        %1792 = vst.msk [vmem:[#allocation2 + $0x10] sm:$0xff] %vm1789, %v1773
        %1793 = vst.msk [vmem:[#allocation2 + $0x18] sm:$0xff] %vm1789, %v1775
        %1794 = vst.msk [vmem:[#allocation2 + $0x20] sm:$0xff] %vm1789, %v1777
        %1795 = vst.msk [vmem:[#allocation2 + $0x28] sm:$0xff] %vm1789, %v1779
        %1796 = vst.msk [vmem:[#allocation2 + $0x30] sm:$0xff] %vm1789, %v1781
        %v1797 = vld [vmem:[%s1639] sm:$0xf]
        %v1798 = vld [vmem:[%s1639 + $0x4] sm:$0xf]
        %v1799 = vld [vmem:[%s1639 + $0x8] sm:$0x1]
        %v1800 = vld [vmem:[%s1639 + $0xc] sm:$0xf]
        %v1801 = vld [vmem:[%s1639 + $0x10] sm:$0xf]
        %v1802 = vld [vmem:[%s1639 + $0x14] sm:$0x1]
        %v1803 = vld [vmem:[%s1639 + $0x18] sm:$0xf]
        %v1804 = vld [vmem:[%s1639 + $0x1c] sm:$0xf]
        %v1805 = vld [vmem:[%s1639 + $0x20] sm:$0x1]
        %v1806 = vld [vmem:[%s1639 + $0x24] sm:$0xf]
        %v1807 = vld [vmem:[%s1639 + $0x28] sm:$0xf]
        %v1808 = vld [vmem:[%s1639 + $0x2c] sm:$0x1]
        %v1809 = vld [vmem:[%s1639 + $0x30] sm:$0xf]
        %v1810 = vld [vmem:[%s1639 + $0x34] sm:$0xf]
        %v1811 = vld [vmem:[%s1639 + $0x38] sm:$0x1]
        %v1812 = vld [vmem:[%s1639 + $0x3c] sm:$0xf]
        %v1813 = vld [vmem:[%s1639 + $0x40] sm:$0xf]
        %v1814 = vld [vmem:[%s1639 + $0x44] sm:$0x1]
        %v1815 = vld [vmem:[%s1639 + $0x48] sm:$0xf]
        %v1816 = vld [vmem:[%s1639 + $0x4c] sm:$0xf]
        %v1817 = vld [vmem:[%s1639 + $0x50] sm:$0x1]
        %v1839 = vunpack.c.l.b16 %v1797
        %v1840 = vunpack.c.l.b16 %v1798
        %v1841 = vunpack.c.l.b16 %v1799
        %v1842 = vunpack.c.l.b16 %v1800
        %v1843 = vunpack.c.l.b16 %v1801
        %v1844 = vunpack.c.l.b16 %v1802
        %v1845 = vunpack.c.l.b16 %v1803
        %v1846 = vunpack.c.l.b16 %v1804
        %v1847 = vunpack.c.l.b16 %v1805
        %v1848 = vunpack.c.l.b16 %v1806
        %v1849 = vunpack.c.l.b16 %v1807
        %v1850 = vunpack.c.l.b16 %v1808
        %v1851 = vunpack.c.l.b16 %v1809
        %v1852 = vunpack.c.l.b16 %v1810
        %v1853 = vunpack.c.l.b16 %v1811
        %v1854 = vunpack.c.l.b16 %v1812
        %v1855 = vunpack.c.l.b16 %v1813
        %v1856 = vunpack.c.l.b16 %v1814
        %v1857 = vunpack.c.l.b16 %v1815
        %v1858 = vunpack.c.l.b16 %v1816
        %v1859 = vunpack.c.l.b16 %v1817
        %v1860 = vpack.c.b16 %v1840, %v1839
        %v1861 = vpack.c.b16 %v1841, %v1841
        %v1862 = vpack.c.b16 %v1843, %v1842
        %v1863 = vpack.c.b16 %v1844, %v1844
        %v1864 = vpack.c.b16 %v1846, %v1845
        %v1865 = vpack.c.b16 %v1847, %v1847
        %v1866 = vpack.c.b16 %v1849, %v1848
        %v1867 = vpack.c.b16 %v1850, %v1850
        %v1868 = vpack.c.b16 %v1852, %v1851
        %v1869 = vpack.c.b16 %v1853, %v1853
        %v1870 = vpack.c.b16 %v1855, %v1854
        %v1871 = vpack.c.b16 %v1856, %v1856
        %v1872 = vpack.c.b16 %v1858, %v1857
        %v1873 = vpack.c.b16 %v1859, %v1859
        %v1875 = vshrl.u32 %v1860, 16
        %v1877 = vshll.u32 %v1860, 16
        %v1879 = vrot.slane %v1877, 1
        %v1880 = vor.u32 %v1875, %v1879
        %v1882 = vshll.u32 %v1861, 16
        %v1884 = vrot.slane %v1882, 1
        %v1885 = vsel %vm1177, %v1880, %v1884
        %v1887 = vshrl.u32 %v1862, 16
        %v1889 = vshll.u32 %v1862, 16
        %v1891 = vrot.slane %v1889, 1
        %v1892 = vor.u32 %v1887, %v1891
        %v1894 = vshll.u32 %v1863, 16
        %v1896 = vrot.slane %v1894, 1
        %v1897 = vsel %vm1177, %v1892, %v1896
        %v1899 = vshrl.u32 %v1864, 16
        %v1901 = vshll.u32 %v1864, 16
        %v1903 = vrot.slane %v1901, 1
        %v1904 = vor.u32 %v1899, %v1903
        %v1906 = vshll.u32 %v1865, 16
        %v1908 = vrot.slane %v1906, 1
        %v1909 = vsel %vm1177, %v1904, %v1908
        %v1911 = vshrl.u32 %v1866, 16
        %v1913 = vshll.u32 %v1866, 16
        %v1915 = vrot.slane %v1913, 1
        %v1916 = vor.u32 %v1911, %v1915
        %v1918 = vshll.u32 %v1867, 16
        %v1920 = vrot.slane %v1918, 1
        %v1921 = vsel %vm1177, %v1916, %v1920
        %v1923 = vshrl.u32 %v1868, 16
        %v1925 = vshll.u32 %v1868, 16
        %v1927 = vrot.slane %v1925, 1
        %v1928 = vor.u32 %v1923, %v1927
        %v1930 = vshll.u32 %v1869, 16
        %v1932 = vrot.slane %v1930, 1
        %v1933 = vsel %vm1177, %v1928, %v1932
        %v1935 = vshrl.u32 %v1870, 16
        %v1937 = vshll.u32 %v1870, 16
        %v1939 = vrot.slane %v1937, 1
        %v1940 = vor.u32 %v1935, %v1939
        %v1942 = vshll.u32 %v1871, 16
        %v1944 = vrot.slane %v1942, 1
        %v1945 = vsel %vm1177, %v1940, %v1944
        %v1947 = vshrl.u32 %v1872, 16
        %v1949 = vshll.u32 %v1872, 16
        %v1951 = vrot.slane %v1949, 1
        %v1952 = vor.u32 %v1947, %v1951
        %v1954 = vshll.u32 %v1873, 16
        %v1956 = vrot.slane %v1954, 1
        %v1957 = vsel %vm1177, %v1952, %v1956
        %1958 = vrot.lane.b32.xlu0 %v1885, 32
        %v1959 = vpop.permute.xlu0 %1958
        %1960 = vrot.lane.b32.xlu0 %v1897, 32
        %v1961 = vpop.permute.xlu0 %1960
        %1962 = vrot.lane.b32.xlu0 %v1909, 32
        %v1963 = vpop.permute.xlu0 %1962
        %1964 = vrot.lane.b32.xlu0 %v1921, 32
        %v1965 = vpop.permute.xlu0 %1964
        %1966 = vrot.lane.b32.xlu0 %v1933, 32
        %v1967 = vpop.permute.xlu0 %1966
        %1968 = vrot.lane.b32.xlu0 %v1945, 32
        %v1969 = vpop.permute.xlu0 %1968
        %1970 = vrot.lane.b32.xlu0 %v1957, 32
        %v1971 = vpop.permute.xlu0 %1970
        %vm1979 = vcmask 294144
        %1980 = vst.msk [vmem:[#allocation2] sm:$0xff] %vm1979, %v1959
        %1981 = vst.msk [vmem:[#allocation2 + $0x8] sm:$0xff] %vm1979, %v1961
        %1982 = vst.msk [vmem:[#allocation2 + $0x10] sm:$0xff] %vm1979, %v1963
        %1983 = vst.msk [vmem:[#allocation2 + $0x18] sm:$0xff] %vm1979, %v1965
        %1984 = vst.msk [vmem:[#allocation2 + $0x20] sm:$0xff] %vm1979, %v1967
        %1985 = vst.msk [vmem:[#allocation2 + $0x28] sm:$0xff] %vm1979, %v1969
        %1986 = vst.msk [vmem:[#allocation2 + $0x30] sm:$0xff] %vm1979, %v1971
        %v1987 = vld [vmem:[#allocation2] sm:$0xff]
        %v1988 = vld [vmem:[#allocation2 + $0x8] sm:$0xff]
        %v1989 = vld [vmem:[#allocation2 + $0x10] sm:$0xff]
        %v1990 = vld [vmem:[#allocation2 + $0x18] sm:$0xff]
        %v1991 = vld [vmem:[#allocation2 + $0x20] sm:$0xff]
        %v1992 = vld [vmem:[#allocation2 + $0x28] sm:$0xff]
        %v1993 = vld [vmem:[#allocation2 + $0x30] sm:$0xff]
        %v1994 = vld [vmem:[%s939] sm:$0xf]
        %v1995 = vld [vmem:[%s939 + $0x4] sm:$0xf]
        %v1996 = vld [vmem:[%s939 + $0x8] sm:$0xf]
        %v1997 = vld [vmem:[%s939 + $0xc] sm:$0xf]
        %v1998 = vld [vmem:[%s939 + $0x10] sm:$0x3]
        %v1999 = vld [vmem:[%s942] sm:$0x1]
        %v2001 = vlaneseq
        %v2002 = vshrl.u32 %v2001, 7
        %v2003 = vsub.s32 0, %v2002
        %v2004 = vrot.slane %v1999, %v2003
        %v2011 = vunpack.c.l.b16 %v1994
        %v2012 = vunpack.c.l.b16 %v1995
        %v2013 = vunpack.c.l.b16 %v1996
        %v2014 = vunpack.c.l.b16 %v1997
        %v2015 = vunpack.c.l.b16 %v1998
        %v2016 = vpack.c.b16 %v2012, %v2011
        %v2017 = vpack.c.b16 %v2014, %v2013
        %v2018 = vpack.c.b16 %v2015, %v2015
        %vm2021 = vcmask 293888
        %v2023 = vsel %vm2021, %v1987, 0
        %v2026 = vsel %vm2021, %v1988, 0
        %v2029 = vsel %vm2021, %v1989, 0
        %v2032 = vsel %vm2021, %v1990, 0
        %v2035 = vsel %vm2021, %v1991, 0
        %v2038 = vsel %vm2021, %v1992, 0
        %v2041 = vsel %vm2021, %v1993, 0
        %vm2043 = vcmask 1041408
        %v2045 = vsel %vm2043, %v2018, 0
        %2047 = vmatprep.subr.bf16.mxu0 0
        %2048 = vmatpush1.bf16.msra.mxu0 %v2016
        %2049 = vmatprep.subr.bf16.mxu0 0
        %2050 = vmatpush1.bf16.msra.mxu0 %v2017
        %2051 = vmatprep.subr.bf16.mxu0 0
        %2052 = vmatpush1.bf16.msra.mxu0 %v2045
        %2053 = vmatprep.subr.bf16.mxu0 0
        %2054 = vmatpush1.bf16.msra.mxu0 0
        %2055 = vmatprep.subr.bf16.mxu0 0
        %2056 = vmatpush1.bf16.msra.mxu0 0
        %2057 = vmatprep.subr.bf16.mxu0 0
        %2058 = vmatpush1.bf16.msra.mxu0 0
        %2059 = vmatprep.subr.bf16.mxu0 0
        %2060 = vmatpush1.bf16.msra.mxu0 0
        %2061 = vmatprep.subr.bf16.mxu0 0
        %2062 = vmatpush1.bf16.msra.mxu0 0
        %2063 = vmatprep.subr.bf16.mxu0 0
        %2064 = vmatpush1.bf16.msra.mxu0 0
        %2065 = vmatprep.subr.bf16.mxu0 0
        %2066 = vmatpush1.bf16.msra.mxu0 0
        %2067 = vmatprep.subr.bf16.mxu0 0
        %2068 = vmatpush1.bf16.msra.mxu0 0
        %2069 = vmatprep.subr.bf16.mxu0 0
        %2070 = vmatpush1.bf16.msra.mxu0 0
        %2071 = vmatprep.subr.bf16.mxu0 0
        %2072 = vmatpush1.bf16.msra.mxu0 0
        %2073 = vmatprep.subr.bf16.mxu0 0
        %2074 = vmatpush1.bf16.msra.mxu0 0
        %2075 = vmatprep.subr.bf16.mxu0 0
        %2076 = vmatpush1.bf16.msra.mxu0 0
        %2077 = vmatprep.subr.bf16.mxu0 0
        %2078 = vmatpush1.bf16.msra.mxu0 0
        %2079 = vmatprep.mubr.bf16.mxu0 0
        %2080 = vmatmul.mubr.bf16.gmra.mrb[0].mxu0 %v2023
        %v2081 = vpop.f32.mrb[0].mxu0
        %v2082 = vadd.f32 %v2004, %v2081
        %v2083 = vpop.f32.mrb[0].mxu0
        %v2084 = vpop.f32.mrb[0].mxu0
        %v2085 = vadd.f32 %v2004, %v2084
        %v2086 = vpop.f32.mrb[0].mxu0
        %2087 = vmatprep.mubr.bf16.mxu0 0
        %2088 = vmatmul.mubr.bf16.gmra.mrb[0].mxu0 %v2026
        %v2089 = vpop.f32.mrb[0].mxu0
        %v2090 = vadd.f32 %v2004, %v2089
        %v2091 = vpop.f32.mrb[0].mxu0
        %v2092 = vpop.f32.mrb[0].mxu0
        %v2093 = vadd.f32 %v2004, %v2092
        %v2094 = vpop.f32.mrb[0].mxu0
        %2095 = vmatprep.mubr.bf16.mxu0 0
        %2096 = vmatmul.mubr.bf16.gmra.mrb[0].mxu0 %v2029
        %v2097 = vpop.f32.mrb[0].mxu0
        %v2098 = vadd.f32 %v2004, %v2097
        %v2099 = vpop.f32.mrb[0].mxu0
        %v2100 = vpop.f32.mrb[0].mxu0
        %v2101 = vadd.f32 %v2004, %v2100
        %v2102 = vpop.f32.mrb[0].mxu0
        %2103 = vmatprep.mubr.bf16.mxu0 0
        %2104 = vmatmul.mubr.bf16.gmra.mrb[0].mxu0 %v2032
        %v2105 = vpop.f32.mrb[0].mxu0
        %v2106 = vadd.f32 %v2004, %v2105
        %v2107 = vpop.f32.mrb[0].mxu0
        %v2108 = vpop.f32.mrb[0].mxu0
        %v2109 = vadd.f32 %v2004, %v2108
        %v2110 = vpop.f32.mrb[0].mxu0
        %2111 = vmatprep.mubr.bf16.mxu0 0
        %2112 = vmatmul.mubr.bf16.gmra.mrb[0].mxu0 %v2035
        %v2113 = vpop.f32.mrb[0].mxu0
        %v2114 = vadd.f32 %v2004, %v2113
        %v2115 = vpop.f32.mrb[0].mxu0
        %v2116 = vpop.f32.mrb[0].mxu0
        %v2117 = vadd.f32 %v2004, %v2116
        %v2118 = vpop.f32.mrb[0].mxu0
        %2119 = vmatprep.mubr.bf16.mxu0 0
        %2120 = vmatmul.mubr.bf16.gmra.mrb[0].mxu0 %v2038
        %v2121 = vpop.f32.mrb[0].mxu0
        %v2122 = vadd.f32 %v2004, %v2121
        %v2123 = vpop.f32.mrb[0].mxu0
        %v2124 = vpop.f32.mrb[0].mxu0
        %v2125 = vadd.f32 %v2004, %v2124
        %v2126 = vpop.f32.mrb[0].mxu0
        %2127 = vmatprep.mubr.bf16.mxu0 0
        %2128 = vmatmul.mubr.bf16.gmra.mrb[0].mxu0 %v2041
        %v2129 = vpop.f32.mrb[0].mxu0
        %v2130 = vadd.f32 %v2004, %v2129
        %v2131 = vpop.f32.mrb[0].mxu0
        %v2132 = vpop.f32.mrb[0].mxu0
        %v2133 = vadd.f32 %v2004, %v2132
        %v2134 = vpop.f32.mrb[0].mxu0
        %2135 = vdwg.mxu0
        %2136 = vst [vmem:[%s954] sm:$0xff] %v2082
        %2137 = vst [vmem:[%s954 + $0x8] sm:$0xff] %v2085
        %2138 = vst [vmem:[%s954 + $0x10] sm:$0xff] %v2090
        %2139 = vst [vmem:[%s954 + $0x18] sm:$0xff] %v2093
        %2140 = vst [vmem:[%s954 + $0x20] sm:$0xff] %v2098
        %2141 = vst [vmem:[%s954 + $0x28] sm:$0xff] %v2101
        %2142 = vst [vmem:[%s954 + $0x30] sm:$0xff] %v2106
        %2143 = vst [vmem:[%s954 + $0x38] sm:$0xff] %v2109
        %2144 = vst [vmem:[%s954 + $0x40] sm:$0xff] %v2114
        %2145 = vst [vmem:[%s954 + $0x48] sm:$0xff] %v2117
        %2146 = vst [vmem:[%s954 + $0x50] sm:$0xff] %v2122
        %2147 = vst [vmem:[%s954 + $0x58] sm:$0xff] %v2125
        %2148 = vst [vmem:[%s954 + $0x60] sm:$0xff] %v2130
        %2149 = vst [vmem:[%s954 + $0x68] sm:$0xff] %v2133
        %s2150 = smul.u32 14, %s21
        %p2151 = scmp.lt.s32.totalorder %s19, 1
        %s2152 = scalar_select %p2151, %s19, 1
        %p2153 = scmp.lt.s32.totalorder %s2150, 13
        %s2154 = scalar_select %p2153, %s2150, 13
        %p2155 = scmp.lt.s32.totalorder %s20, 0
        %s2156 = scalar_select %p2155, %s20, 0
        %s2157 = sadd.s32 %s2156, %s2154
        %s2158 = smul.addr %s2152, 14
        %s2159 = sadd.s32 %s2157, %s2158
        %s2160 = smul.addr %s2159, 8
        %s2161 = scalar_lea.vmem %s3, %s2160
        // Predicated region
        $region74: #{conv2d_fft_pallas.1} parent=68 // pred_check
          %p2162 = pneg %p135
        $region75: #{conv2d_fft_pallas.1} parent=68 // pred_check_branch
          %2164 = sbr.rel (%p2162) target = $region77
        $region76: #{conv2d_fft_pallas.1} parent=68 // pred_region
          %s2165 = smul.u32 14, %s21
        $region77: #{conv2d_fft_pallas.1} parent=68 // pred_fallthru
          _
      $region69: #{conv2d_fft_pallas.1} parent=5 // pred_fallthru
        _
      %p2166 = scmp.le.s32.totalorder 2, %s9
      // Predicated region
      $region78: #{conv2d_fft_pallas.1} parent=5 // pred_check
        %p2167 = pneg %p2166
      $region79: #{conv2d_fft_pallas.1} parent=5 // pred_check_branch
        %2169 = sbr.rel (%p2167) target = $region81
      $region80: #{conv2d_fft_pallas.1} parent=5 // pred_region
        %s2170 = ssub.s32 %s9, 2
        // Predicated region
        $region82: #{conv2d_fft_pallas.1} parent=80 // pred_check
          %p2171 = pneg %p141
        $region83: #{conv2d_fft_pallas.1} parent=80 // pred_check_branch
          %2173 = sbr.rel (%p2171) target = $region85
        $region84: #{conv2d_fft_pallas.1} parent=80 // pred_region
          %s2174 = smul.u32 14, %s24
          %p2175 = scmp.lt.s32.totalorder %s22, 1
          %s2176 = scalar_select %p2175, %s22, 1
          %p2177 = scmp.lt.s32.totalorder %s2174, 13
          %s2178 = scalar_select %p2177, %s2174, 13
          %p2179 = scmp.lt.s32.totalorder %s23, 0
          %s2180 = scalar_select %p2179, %s23, 0
          %s2181 = sadd.s32 %s2180, %s2178
          %s2182 = smul.addr %s2176, 14
          %s2183 = sadd.s32 %s2181, %s2182
          %s2184 = smul.addr %s2183, 8
          %s2185 = scalar_lea.vmem %s3, %s2184
        $region85: #{conv2d_fft_pallas.1} parent=80 // pred_fallthru
          _
      $region81: #{conv2d_fft_pallas.1} parent=5 // pred_fallthru
        _
    $region6: #{conv2d_fft_pallas.1} parent=1 // loop_footer
      %s13 = sadd.s32 1, %s9
    $region7: #{conv2d_fft_pallas.1} parent=1 // loop_footer_branch
      %8 = sbr.rel target = $region3
    $region8: #{conv2d_fft_pallas.1} parent=1 // loop_exit
      _

</llo_original>
